<compile_context>
chip_gen: v6e
topology: v6e:2x2x1
jax: 0.10.0
libtpu: 0.0.40
codegen_flags: <defaults>
</compile_context>

<pallas_src>
import functools
import math

import jax
import jax.numpy as jnp
from jax import lax
from jax.experimental import pallas as pl
from jax.experimental.pallas import tpu as pltpu


def _decoder_kernel(za_ref, zbt_ref, out_ref, *, apply_sigmoid: bool, tn: int,
                    resident: bool, sigmoid_in_out_dtype: bool):
    # za_ref : (tm, D)   row-block of z for the i axis.
    # zbt_ref: (D, Npad) resident z.T (sliced per j-block in-kernel), or
    #          (D, tn)   streamed column-block of z.T.
    if resident:
        j = pl.program_id(1)
        start = pl.multiple_of(j * tn, tn)
        zbt = zbt_ref[:, pl.ds(start, tn)]
    else:
        zbt = zbt_ref[...]

    # (tm, D) @ (D, tn): MXU-native operand layouts, f32 accumulation.
    acc = lax.dot_general(
        za_ref[...], zbt,
        dimension_numbers=(((1,), (0,)), ((), ())),
        preferred_element_type=jnp.float32,
    )
    if apply_sigmoid:
        if sigmoid_in_out_dtype:
            acc = acc.astype(out_ref.dtype)   # bf16 tanh on v6e/v7x EUP
        # Exact sigmoid as 0.5*tanh(0.5*x)+0.5 -> single EUP op (idle slot).
        acc = 0.5 * jnp.tanh(0.5 * acc) + 0.5
    out_ref[...] = acc.astype(out_ref.dtype)


def _round_up(x: int, m: int) -> int:
    return (x + m - 1) // m * m


def _vmem_capacity_bytes() -> int:
    """Per-TensorCore VMEM capacity; conservative fallback if unavailable."""
    try:
        return int(pltpu.get_tpu_info().vmem_capacity_bytes)
    except Exception:
        return 64 * 1024 * 1024  # v7x per-TC figure (safe everywhere)


def _is_pre_v6_chip() -> bool:
    """True on chips without bf16 EUP/VPU (v5e and older)."""
    try:
        kind = jax.devices()[0].device_kind.lower()
        return any(t in kind for t in ("v2", "v3", "v4", "v5"))
    except Exception:
        return True  # conservative: keep transcendentals in f32


def decoder_matmul(z: jax.Array, *, apply_sigmoid: bool,
                   tm: int = 512, tn: int = 1024,
                   compute_dtype=jnp.bfloat16, out_dtype=jnp.bfloat16,
                   force_resident: bool | None = None):
    """Computes (sigmoid)(z @ z.T) with a tiled Pallas TPU kernel.

    Operands are quantized once to `compute_dtype` (bf16 by default, exact
    products accumulated in f32 on the MXU); the output defaults to bf16
    because the kernel is HBM-writeback bound -- pass out_dtype=jnp.float32
    for a full-precision adjacency.
    """
    n, d = z.shape
    in_bytes = jnp.dtype(compute_dtype).itemsize
    out_bytes = jnp.dtype(out_dtype).itemsize

    # VMEM budget is per TensorCore (megacore shards the grid across TCs and
    # each TC holds its own copy of the resident block). Leave headroom for
    # compiler-internal scratch/semaphores.
    vmem_cap = _vmem_capacity_bytes()
    budget = max(vmem_cap - 8 * 1024 * 1024, 24 * 1024 * 1024)

    # Tiles are multiples of 128 (lane-dense output, tn = lane dim); arbitrary
    # N is handled by zero-padding the rows of z up to a tile multiple.
    n128 = _round_up(n, 128)
    tm = min(tm, n128)
    tn = min(tn, n128)

    def _streamed_bytes(tm_, tn_):
        return (2 * tm_ * d * in_bytes        # double-buffered A row-blocks
                + 2 * d * tn_ * in_bytes      # double-buffered B column-blocks
                + 2 * tm_ * tn_ * out_bytes)  # double-buffered output tile

    # Shrink tiles until even the streamed working set fits the budget.
    while _streamed_bytes(tm, tn) > budget and (tm > 128 or tn > 128):
        if tn >= tm and tn > 128:
            tn //= 2
        else:
            tm //= 2

    n_pad = _round_up(n, math.lcm(tm, tn))

    zc = z.astype(compute_dtype)              # cast once; halves operand DMA
    if n_pad != n:
        zc = jnp.pad(zc, ((0, n_pad - n), (0, 0)))
    zct = zc.T                                # (D, Npad): MXU-native j-operand

    resident_bytes = (n_pad * d * in_bytes        # single-buffered resident z.T
                      + 2 * tm * d * in_bytes     # double-buffered A blocks
                      + 2 * tm * tn * out_bytes)  # double-buffered output tile
    if force_resident is None:
        resident = resident_bytes <= budget
    else:
        resident = force_resident
    est_bytes = resident_bytes if resident else _streamed_bytes(tm, tn)

    if resident:
        # Constant block index + single buffer: z.T is DMA'd from HBM exactly
        # once and stays resident for the whole grid.
        b_spec = pl.BlockSpec((d, n_pad), lambda i, j: (0, 0),
                              pipeline_mode=pl.Buffered(1))
    else:
        b_spec = pl.BlockSpec((d, tn), lambda i, j: (0, j))

    sigmoid_in_out_dtype = (
        apply_sigmoid
        and jnp.dtype(out_dtype) == jnp.dtype(jnp.bfloat16)
        and not _is_pre_v6_chip())

    kernel = functools.partial(
        _decoder_kernel, apply_sigmoid=apply_sigmoid, tn=tn,
        resident=resident, sigmoid_in_out_dtype=sigmoid_in_out_dtype)

    grid_spec = pltpu.PrefetchScalarGridSpec(
        num_scalar_prefetch=0,
        grid=(n_pad // tm, n_pad // tn),
        in_specs=[
            pl.BlockSpec((tm, d), lambda i, j: (i, 0)),  # i row-block of z
            b_spec,                                      # z.T (resident/streamed)
        ],
        out_specs=pl.BlockSpec((tm, tn), lambda i, j: (i, j)),
    )

    vmem_limit = int(min(max(est_bytes + (est_bytes >> 1), 32 * 1024 * 1024),
                         vmem_cap))

    out = pl.pallas_call(
        kernel,
        out_shape=jax.ShapeDtypeStruct((n_pad, n_pad), out_dtype),
        grid_spec=grid_spec,
        compiler_params=pltpu.CompilerParams(
            dimension_semantics=("parallel", "parallel"),
            vmem_limit_bytes=vmem_limit,
        ),
    )(zc, zct)

    if n_pad != n:
        out = out[:n, :n]
    return out


def decoder_forward(z: jax.Array, *, dropout_p: float = 0.1,
                    training: bool = True, rng: jax.Array | None = None,
                    tm: int = 512, tn: int = 1024,
                    compute_dtype=jnp.bfloat16, out_dtype=jnp.bfloat16):
    """Full Decoder.forward: dropout glue in JAX, matmul(+sigmoid) in Pallas."""
    if training and dropout_p > 0.0:
        assert rng is not None, "training-mode dropout needs an rng key"
        keep = 1.0 - dropout_p
        mask = jax.random.bernoulli(rng, p=keep, shape=z.shape)
        z = jnp.where(mask, z / keep, jnp.zeros_like(z)).astype(z.dtype)
    # TODO(synk): dropout could be fused in-kernel with pltpu.prng_seed +
    # grid-invariant sampling keyed by the row-block index; kept in JAX glue
    # since the O(N*D) pass is minor next to the O(N^2) output writeback.
    return decoder_matmul(z, apply_sigmoid=training, tm=tm, tn=tn,
                          compute_dtype=compute_dtype, out_dtype=out_dtype)


if __name__ == "__main__":
    key = jax.random.PRNGKey(0)
    k_z, k_drop, k_z2 = jax.random.split(key, 3)

    N, D = 512, 64  # small node-embedding matrix consistent with a VGAE latent
    z = jax.random.normal(k_z, (N, D), dtype=jnp.float32)

    # Reference uses the same bf16 operand quantization as the kernel.
    z_q = z.astype(jnp.bfloat16).astype(jnp.float32)
    ref_eval = z_q @ z_q.T

    # --- eval mode: dropout = identity, no sigmoid, bf16 output (default) ---
    out_eval = jax.block_until_ready(decoder_forward(z, training=False))
    assert out_eval.shape == (N, N)
    assert jnp.allclose(out_eval.astype(jnp.float32), ref_eval,
                        atol=5e-1, rtol=5e-2), "eval mismatch"

    # --- f32 output path (full-precision adjacency) ---------------------------
    out_f32 = jax.block_until_ready(
        decoder_matmul(z, apply_sigmoid=False, out_dtype=jnp.float32))
    assert out_f32.dtype == jnp.float32
    assert jnp.allclose(out_f32, ref_eval, atol=1e-1, rtol=2e-2), "f32 mismatch"

    # --- N not divisible by 128: exercises the zero-padded grid --------------
    N2 = 300
    z2 = jax.random.normal(k_z2, (N2, D), dtype=jnp.float32)
    z2_q = z2.astype(jnp.bfloat16).astype(jnp.float32)
    ref2 = z2_q @ z2_q.T
    out2 = jax.block_until_ready(decoder_forward(z2, training=False))
    assert out2.shape == (N2, N2)
    assert jnp.allclose(out2.astype(jnp.float32), ref2,
                        atol=5e-1, rtol=5e-2), "padded-N mismatch"

    # --- streamed (non-resident) fallback path --------------------------------
    out_stream = jax.block_until_ready(
        decoder_matmul(z, apply_sigmoid=False, tm=256, tn=256,
                       force_resident=False))
    assert jnp.allclose(out_stream.astype(jnp.float32), ref_eval,
                        atol=5e-1, rtol=5e-2), "stream mismatch"

    # --- training mode: dropout mask + fused sigmoid --------------------------
    keep = 0.9
    mask = jax.random.bernoulli(k_drop, p=keep, shape=z.shape)
    z_d = jnp.where(mask, z / keep, 0.0)
    z_dq = z_d.astype(jnp.bfloat16).astype(jnp.float32)
    ref_train = jax.nn.sigmoid(z_dq @ z_dq.T)
    out_train = jax.block_until_ready(
        decoder_forward(z, dropout_p=0.1, training=True, rng=k_drop))
    assert jnp.allclose(out_train.astype(jnp.float32), ref_train,
                        atol=3e-2, rtol=3e-2), "train mismatch"

    print("KERNEL_OK")
</pallas_src>

<mosaic_0001>
module attributes {stable_mosaic.version = 11 : i64} {
  func.func @_decoder_kernel(%arg0: i32, %arg1: i32, %arg2: memref<512x64xbf16, #tpu.memory_space<vmem>>, %arg3: memref<64x512xbf16, #tpu.memory_space<vmem>>, %arg4: memref<512x512xbf16, #tpu.memory_space<vmem>>) attributes {dimension_semantics = [#tpu.dimension_semantics<parallel>, #tpu.dimension_semantics<parallel>], iteration_bounds = array<i64: 1, 1>, scalar_prefetch = 0 : i64, scratch_operands = 0 : i64, tpu.core_type = #tpu.core_type<tc>, window_params = [{transform_indices = @transform_0, window_bounds = array<i64: 512, 64>}, {pipeline_mode = #tpu.pipeline_mode<synchronous>, transform_indices = @transform_1, window_bounds = array<i64: 64, 512>}, {transform_indices = @transform_2, window_bounds = array<i64: 512, 512>}]} {
    %c512_i32 = arith.constant 512 : i32
    %0 = arith.muli %arg1, %c512_i32 : i32
    %1 = tpu.assume_multiple %0, 512 : i32
    %c0 = arith.constant 0 : index
    %2 = arith.index_cast %1 : i32 to index
    %3 = vector.load %arg3[%c0, %2] : memref<64x512xbf16, #tpu.memory_space<vmem>>, vector<64x512xbf16>
    %c0_0 = arith.constant 0 : index
    %c0_1 = arith.constant 0 : index
    %4 = vector.load %arg2[%c0_0, %c0_1] : memref<512x64xbf16, #tpu.memory_space<vmem>>, vector<512x64xbf16>
    %cst = arith.constant dense<0.000000e+00> : vector<512x512xf32>
    %5 = tpu.matmul %4, %3, %cst {dimension_numbers = #tpu.dot_dimension_numbers<[1], [0], [0], [1], [0, 0, 1, 1], [], []>} : vector<512x64xbf16>, vector<64x512xbf16>, vector<512x512xf32> -> vector<512x512xf32>
    %6 = arith.truncf %5 : vector<512x512xf32> to vector<512x512xbf16>
    %c0_2 = arith.constant 0 : index
    %c0_3 = arith.constant 0 : index
    %7 = vector.load %arg4[%c0_2, %c0_3] : memref<512x512xbf16, #tpu.memory_space<vmem>>, vector<512x512xbf16>
    tpu.vector_store %arg4[%c0_2, %c0_3], %6 {strides = array<i32>} : memref<512x512xbf16, #tpu.memory_space<vmem>>, vector<512x512xbf16>,
    return
  }
  func.func @transform_0(%arg0: i32, %arg1: i32) -> (i32, i32) {
    %c0_i32 = arith.constant 0 : i32
    %c0_i32_0 = arith.constant 0 : i32
    return %arg0, %c0_i32 : i32, i32
  }
  func.func @transform_1(%arg0: i32, %arg1: i32) -> (i32, i32) {
    %c0_i32 = arith.constant 0 : i32
    %c0_i32_0 = arith.constant 0 : i32
    %c0_i32_1 = arith.constant 0 : i32
    return %c0_i32, %c0_i32_0 : i32, i32
  }
  func.func @transform_2(%arg0: i32, %arg1: i32) -> (i32, i32) {
    %c0_i32 = arith.constant 0 : i32
    return %arg0, %arg1 : i32, i32
  }
}

</mosaic_0001>

<llo_original>
// kernel: tpu_custom_call.1
$region0: #{tpu_custom_call.1}
  #allocation0 [shape = 'u32[]', space=smem, size = 0x4, offset = 0x4, fixed_abs, tag = 'smem constant byte address 0x4 - core index']
  #allocation1 [shape = 'u32[144,128]{1,0:T(1,128)}', space=vmem, size = 0x12000, scoped, tag = 'internal scratch']
  %s0 = inlined_call_operand.vmem [shape: bf16[512,64], index: 0, kind: input, shape index: {}]
  %s1 = inlined_call_operand.vmem [shape: bf16[64,512], index: 1, kind: input, shape index: {}]
  %s2 = inlined_call_operand.hbm [shape: bf16[512,512], index: 2, kind: output, shape index: {}]
  %s3 = sld [smem:[#allocation0]]
  $region18: #{tpu_custom_call.1} parent=0
    _
  %s5 = ssub.s32 1, %s3
  %s6 = scalar_select 0, %s5, %s3
  $region1: #{tpu_custom_call.1} parent=0
    #allocation2 [shape = 'u8[524288]{0}', space=vmem, size = 0x80000, scoped, tag = 'output window, operand 0, single buffered']
    #allocation3 [shape = 's32[1]{0}', space=sflag, size = 0x4, scoped, tag = 'scoped memory for tpu_custom_call.1']
    %7 = vsyncpa [#allocation3], 0
    // Predicated region
    $region2: #{tpu_custom_call.1} parent=1 // pred_check
      _
    $region3: #{tpu_custom_call.1} parent=1 // pred_check_branch
      %9 = sbr.rel (0) target = $region5
    $region4: #{tpu_custom_call.1} parent=1 // pred_region
      _
    $region5: #{tpu_custom_call.1} parent=1 // pred_fallthru
      _
    // Predicated region
    $region6: #{tpu_custom_call.1} parent=1 // pred_check
      _
    $region7: #{tpu_custom_call.1} parent=1 // pred_check_branch
      %11 = sbr.rel (0) target = $region9
    $region8: #{tpu_custom_call.1} parent=1 // pred_region
      _
    $region9: #{tpu_custom_call.1} parent=1 // pred_fallthru
      _
    %s13 = smul.u32 0, 512
    %s14 = sshra.s32 %s13, 7
    %s15 = sand.u32 %s13, 127
    %s16 = smul.addr %s14, 4
    %s17 = scalar_lea.vmem %s1, %s16
    %v18 = vld [vmem:[%s17] sm:$0xff]
    %v19 = vld [vmem:[%s17 + $0x8] sm:$0xff]
    %v20 = vld [vmem:[%s17 + $0x10] sm:$0xff]
    %v21 = vld [vmem:[%s17 + $0x18] sm:$0xff]
    %v22 = vld [vmem:[%s17 + $0x20] sm:$0xff]
    %v23 = vld [vmem:[%s17 + $0x28] sm:$0xff]
    %v24 = vld [vmem:[%s17 + $0x30] sm:$0xff]
    %v25 = vld [vmem:[%s17 + $0x38] sm:$0xff]
    %v26 = vld [vmem:[%s17 + $0x40] sm:$0xff]
    %v27 = vld [vmem:[%s17 + $0x48] sm:$0xff]
    %v28 = vld [vmem:[%s17 + $0x50] sm:$0xff]
    %v29 = vld [vmem:[%s17 + $0x58] sm:$0xff]
    %v30 = vld [vmem:[%s17 + $0x60] sm:$0xff]
    %v31 = vld [vmem:[%s17 + $0x68] sm:$0xff]
    %v32 = vld [vmem:[%s17 + $0x70] sm:$0xff]
    %v33 = vld [vmem:[%s17 + $0x78] sm:$0xff]
    %v34 = vld [vmem:[%s0] sm:$0xf]
    %v35 = vld [vmem:[%s0 + $0x4] sm:$0xf]
    %v36 = vld [vmem:[%s0 + $0x8] sm:$0xf]
    %v37 = vld [vmem:[%s0 + $0xc] sm:$0xf]
    %v38 = vld [vmem:[%s0 + $0x10] sm:$0xf]
    %v39 = vld [vmem:[%s0 + $0x14] sm:$0xf]
    %v40 = vld [vmem:[%s0 + $0x18] sm:$0xf]
    %v41 = vld [vmem:[%s0 + $0x1c] sm:$0xf]
    %v42 = vld [vmem:[%s0 + $0x20] sm:$0xf]
    %v43 = vld [vmem:[%s0 + $0x24] sm:$0xf]
    %v44 = vld [vmem:[%s0 + $0x28] sm:$0xf]
    %v45 = vld [vmem:[%s0 + $0x2c] sm:$0xf]
    %v46 = vld [vmem:[%s0 + $0x30] sm:$0xf]
    %v47 = vld [vmem:[%s0 + $0x34] sm:$0xf]
    %v48 = vld [vmem:[%s0 + $0x38] sm:$0xf]
    %v49 = vld [vmem:[%s0 + $0x3c] sm:$0xf]
    %v50 = vld [vmem:[%s0 + $0x40] sm:$0xf]
    %v51 = vld [vmem:[%s0 + $0x44] sm:$0xf]
    %v52 = vld [vmem:[%s0 + $0x48] sm:$0xf]
    %v53 = vld [vmem:[%s0 + $0x4c] sm:$0xf]
    %v54 = vld [vmem:[%s0 + $0x50] sm:$0xf]
    %v55 = vld [vmem:[%s0 + $0x54] sm:$0xf]
    %v56 = vld [vmem:[%s0 + $0x58] sm:$0xf]
    %v57 = vld [vmem:[%s0 + $0x5c] sm:$0xf]
    %v58 = vld [vmem:[%s0 + $0x60] sm:$0xf]
    %v59 = vld [vmem:[%s0 + $0x64] sm:$0xf]
    %v60 = vld [vmem:[%s0 + $0x68] sm:$0xf]
    %v61 = vld [vmem:[%s0 + $0x6c] sm:$0xf]
    %v62 = vld [vmem:[%s0 + $0x70] sm:$0xf]
    %v63 = vld [vmem:[%s0 + $0x74] sm:$0xf]
    %v64 = vld [vmem:[%s0 + $0x78] sm:$0xf]
    %v65 = vld [vmem:[%s0 + $0x7c] sm:$0xf]
    %v66 = vld [vmem:[%s0 + $0x80] sm:$0xf]
    %v67 = vld [vmem:[%s0 + $0x84] sm:$0xf]
    %v68 = vld [vmem:[%s0 + $0x88] sm:$0xf]
    %v69 = vld [vmem:[%s0 + $0x8c] sm:$0xf]
    %v70 = vld [vmem:[%s0 + $0x90] sm:$0xf]
    %v71 = vld [vmem:[%s0 + $0x94] sm:$0xf]
    %v72 = vld [vmem:[%s0 + $0x98] sm:$0xf]
    %v73 = vld [vmem:[%s0 + $0x9c] sm:$0xf]
    %v74 = vld [vmem:[%s0 + $0xa0] sm:$0xf]
    %v75 = vld [vmem:[%s0 + $0xa4] sm:$0xf]
    %v76 = vld [vmem:[%s0 + $0xa8] sm:$0xf]
    %v77 = vld [vmem:[%s0 + $0xac] sm:$0xf]
    %v78 = vld [vmem:[%s0 + $0xb0] sm:$0xf]
    %v79 = vld [vmem:[%s0 + $0xb4] sm:$0xf]
    %v80 = vld [vmem:[%s0 + $0xb8] sm:$0xf]
    %v81 = vld [vmem:[%s0 + $0xbc] sm:$0xf]
    %v82 = vld [vmem:[%s0 + $0xc0] sm:$0xf]
    %v83 = vld [vmem:[%s0 + $0xc4] sm:$0xf]
    %v84 = vld [vmem:[%s0 + $0xc8] sm:$0xf]
    %v85 = vld [vmem:[%s0 + $0xcc] sm:$0xf]
    %v86 = vld [vmem:[%s0 + $0xd0] sm:$0xf]
    %v87 = vld [vmem:[%s0 + $0xd4] sm:$0xf]
    %v88 = vld [vmem:[%s0 + $0xd8] sm:$0xf]
    %v89 = vld [vmem:[%s0 + $0xdc] sm:$0xf]
    %v90 = vld [vmem:[%s0 + $0xe0] sm:$0xf]
    %v91 = vld [vmem:[%s0 + $0xe4] sm:$0xf]
    %v92 = vld [vmem:[%s0 + $0xe8] sm:$0xf]
    %v93 = vld [vmem:[%s0 + $0xec] sm:$0xf]
    %v94 = vld [vmem:[%s0 + $0xf0] sm:$0xf]
    %v95 = vld [vmem:[%s0 + $0xf4] sm:$0xf]
    %v96 = vld [vmem:[%s0 + $0xf8] sm:$0xf]
    %v97 = vld [vmem:[%s0 + $0xfc] sm:$0xf]
    %v162 = vunpack.c.l.b16 %v34
    %v163 = vunpack.c.l.b16 %v35
    %v164 = vunpack.c.l.b16 %v36
    %v165 = vunpack.c.l.b16 %v37
    %v166 = vunpack.c.l.b16 %v38
    %v167 = vunpack.c.l.b16 %v39
    %v168 = vunpack.c.l.b16 %v40
    %v169 = vunpack.c.l.b16 %v41
    %v170 = vunpack.c.l.b16 %v42
    %v171 = vunpack.c.l.b16 %v43
    %v172 = vunpack.c.l.b16 %v44
    %v173 = vunpack.c.l.b16 %v45
    %v174 = vunpack.c.l.b16 %v46
    %v175 = vunpack.c.l.b16 %v47
    %v176 = vunpack.c.l.b16 %v48
    %v177 = vunpack.c.l.b16 %v49
    %v178 = vunpack.c.l.b16 %v50
    %v179 = vunpack.c.l.b16 %v51
    %v180 = vunpack.c.l.b16 %v52
    %v181 = vunpack.c.l.b16 %v53
    %v182 = vunpack.c.l.b16 %v54
    %v183 = vunpack.c.l.b16 %v55
    %v184 = vunpack.c.l.b16 %v56
    %v185 = vunpack.c.l.b16 %v57
    %v186 = vunpack.c.l.b16 %v58
    %v187 = vunpack.c.l.b16 %v59
    %v188 = vunpack.c.l.b16 %v60
    %v189 = vunpack.c.l.b16 %v61
    %v190 = vunpack.c.l.b16 %v62
    %v191 = vunpack.c.l.b16 %v63
    %v192 = vunpack.c.l.b16 %v64
    %v193 = vunpack.c.l.b16 %v65
    %v194 = vunpack.c.l.b16 %v66
    %v195 = vunpack.c.l.b16 %v67
    %v196 = vunpack.c.l.b16 %v68
    %v197 = vunpack.c.l.b16 %v69
    %v198 = vunpack.c.l.b16 %v70
    %v199 = vunpack.c.l.b16 %v71
    %v200 = vunpack.c.l.b16 %v72
    %v201 = vunpack.c.l.b16 %v73
    %v202 = vunpack.c.l.b16 %v74
    %v203 = vunpack.c.l.b16 %v75
    %v204 = vunpack.c.l.b16 %v76
    %v205 = vunpack.c.l.b16 %v77
    %v206 = vunpack.c.l.b16 %v78
    %v207 = vunpack.c.l.b16 %v79
    %v208 = vunpack.c.l.b16 %v80
    %v209 = vunpack.c.l.b16 %v81
    %v210 = vunpack.c.l.b16 %v82
    %v211 = vunpack.c.l.b16 %v83
    %v212 = vunpack.c.l.b16 %v84
    %v213 = vunpack.c.l.b16 %v85
    %v214 = vunpack.c.l.b16 %v86
    %v215 = vunpack.c.l.b16 %v87
    %v216 = vunpack.c.l.b16 %v88
    %v217 = vunpack.c.l.b16 %v89
    %v218 = vunpack.c.l.b16 %v90
    %v219 = vunpack.c.l.b16 %v91
    %v220 = vunpack.c.l.b16 %v92
    %v221 = vunpack.c.l.b16 %v93
    %v222 = vunpack.c.l.b16 %v94
    %v223 = vunpack.c.l.b16 %v95
    %v224 = vunpack.c.l.b16 %v96
    %v225 = vunpack.c.l.b16 %v97
    %v226 = vpack.c.b16 %v163, %v162
    %v227 = vpack.c.b16 %v165, %v164
    %v228 = vpack.c.b16 %v167, %v166
    %v229 = vpack.c.b16 %v169, %v168
    %v230 = vpack.c.b16 %v171, %v170
    %v231 = vpack.c.b16 %v173, %v172
    %v232 = vpack.c.b16 %v175, %v174
    %v233 = vpack.c.b16 %v177, %v176
    %v234 = vpack.c.b16 %v179, %v178
    %v235 = vpack.c.b16 %v181, %v180
    %v236 = vpack.c.b16 %v183, %v182
    %v237 = vpack.c.b16 %v185, %v184
    %v238 = vpack.c.b16 %v187, %v186
    %v239 = vpack.c.b16 %v189, %v188
    %v240 = vpack.c.b16 %v191, %v190
    %v241 = vpack.c.b16 %v193, %v192
    %v242 = vpack.c.b16 %v195, %v194
    %v243 = vpack.c.b16 %v197, %v196
    %v244 = vpack.c.b16 %v199, %v198
    %v245 = vpack.c.b16 %v201, %v200
    %v246 = vpack.c.b16 %v203, %v202
    %v247 = vpack.c.b16 %v205, %v204
    %v248 = vpack.c.b16 %v207, %v206
    %v249 = vpack.c.b16 %v209, %v208
    %v250 = vpack.c.b16 %v211, %v210
    %v251 = vpack.c.b16 %v213, %v212
    %v252 = vpack.c.b16 %v215, %v214
    %v253 = vpack.c.b16 %v217, %v216
    %v254 = vpack.c.b16 %v219, %v218
    %v255 = vpack.c.b16 %v221, %v220
    %v256 = vpack.c.b16 %v223, %v222
    %v257 = vpack.c.b16 %v225, %v224
    %v274 = vunpack.c.l.b16 %v18
    %v275 = vunpack.c.h.b16 %v18
    %v276 = vunpack.c.l.b16 %v19
    %v277 = vunpack.c.h.b16 %v19
    %v278 = vunpack.c.l.b16 %v20
    %v279 = vunpack.c.h.b16 %v20
    %v280 = vunpack.c.l.b16 %v21
    %v281 = vunpack.c.h.b16 %v21
    %v282 = vunpack.c.l.b16 %v22
    %v283 = vunpack.c.h.b16 %v22
    %v284 = vunpack.c.l.b16 %v23
    %v285 = vunpack.c.h.b16 %v23
    %v286 = vunpack.c.l.b16 %v24
    %v287 = vunpack.c.h.b16 %v24
    %v288 = vunpack.c.l.b16 %v25
    %v289 = vunpack.c.h.b16 %v25
    %v290 = vunpack.c.l.b16 %v26
    %v291 = vunpack.c.h.b16 %v26
    %v292 = vunpack.c.l.b16 %v27
    %v293 = vunpack.c.h.b16 %v27
    %v294 = vunpack.c.l.b16 %v28
    %v295 = vunpack.c.h.b16 %v28
    %v296 = vunpack.c.l.b16 %v29
    %v297 = vunpack.c.h.b16 %v29
    %v298 = vunpack.c.l.b16 %v30
    %v299 = vunpack.c.h.b16 %v30
    %v300 = vunpack.c.l.b16 %v31
    %v301 = vunpack.c.h.b16 %v31
    %v302 = vunpack.c.l.b16 %v32
    %v303 = vunpack.c.h.b16 %v32
    %v304 = vunpack.c.l.b16 %v33
    %v305 = vunpack.c.h.b16 %v33
    %v306 = vpack.c.b16 %v278, %v274
    %v307 = vpack.c.b16 %v279, %v275
    %v308 = vpack.c.b16 %v280, %v276
    %v309 = vpack.c.b16 %v281, %v277
    %v310 = vpack.c.b16 %v286, %v282
    %v311 = vpack.c.b16 %v287, %v283
    %v312 = vpack.c.b16 %v288, %v284
    %v313 = vpack.c.b16 %v289, %v285
    %v314 = vpack.c.b16 %v294, %v290
    %v315 = vpack.c.b16 %v295, %v291
    %v316 = vpack.c.b16 %v296, %v292
    %v317 = vpack.c.b16 %v297, %v293
    %v318 = vpack.c.b16 %v302, %v298
    %v319 = vpack.c.b16 %v303, %v299
    %v320 = vpack.c.b16 %v304, %v300
    %v321 = vpack.c.b16 %v305, %v301
    %vm338 = vcmask 523264
    %v340 = vsel %vm338, %v226, 0
    %v343 = vsel %vm338, %v227, 0
    %v346 = vsel %vm338, %v228, 0
    %v349 = vsel %vm338, %v229, 0
    %v352 = vsel %vm338, %v230, 0
    %v355 = vsel %vm338, %v231, 0
    %v358 = vsel %vm338, %v232, 0
    %v361 = vsel %vm338, %v233, 0
    %v364 = vsel %vm338, %v234, 0
    %v367 = vsel %vm338, %v235, 0
    %v370 = vsel %vm338, %v236, 0
    %v373 = vsel %vm338, %v237, 0
    %v376 = vsel %vm338, %v238, 0
    %v379 = vsel %vm338, %v239, 0
    %v382 = vsel %vm338, %v240, 0
    %v385 = vsel %vm338, %v241, 0
    %v388 = vsel %vm338, %v242, 0
    %v391 = vsel %vm338, %v243, 0
    %v394 = vsel %vm338, %v244, 0
    %v397 = vsel %vm338, %v245, 0
    %v400 = vsel %vm338, %v246, 0
    %v403 = vsel %vm338, %v247, 0
    %v406 = vsel %vm338, %v248, 0
    %v409 = vsel %vm338, %v249, 0
    %v412 = vsel %vm338, %v250, 0
    %v415 = vsel %vm338, %v251, 0
    %v418 = vsel %vm338, %v252, 0
    %v421 = vsel %vm338, %v253, 0
    %v424 = vsel %vm338, %v254, 0
    %v427 = vsel %vm338, %v255, 0
    %v430 = vsel %vm338, %v256, 0
    %v433 = vsel %vm338, %v257, 0
    %435 = vmatprep.subr.bf16.mxu0 0
    %436 = vmatpush1.bf16.msra.mxu0 0
    %437 = vmatprep.subr.bf16.mxu0 0
    %438 = vmatpush1.bf16.msra.mxu0 0
    %439 = vmatprep.subr.bf16.mxu0 0
    %440 = vmatpush1.bf16.msra.mxu0 0
    %441 = vmatprep.subr.bf16.mxu0 0
    %442 = vmatpush1.bf16.msra.mxu0 0
    %443 = vmatprep.subr.bf16.mxu0 %v319
    %444 = vmatpush1.bf16.msra.mxu0 %v318
    %445 = vmatprep.subr.bf16.mxu0 %v315
    %446 = vmatpush1.bf16.msra.mxu0 %v314
    %447 = vmatprep.subr.bf16.mxu0 %v311
    %448 = vmatpush1.bf16.msra.mxu0 %v310
    %449 = vmatprep.subr.bf16.mxu0 %v307
    %450 = vmatpush1.bf16.msra.mxu0 %v306
    %451 = vmatprep.subr.bf16.mxu0 0
    %452 = vmatpush2.bf16.msra.mxu0 0
    %453 = vmatprep.subr.bf16.mxu0 0
    %454 = vmatpush2.bf16.msra.mxu0 0
    %455 = vmatprep.subr.bf16.mxu0 0
    %456 = vmatpush2.bf16.msra.mxu0 0
    %457 = vmatprep.subr.bf16.mxu0 0
    %458 = vmatpush2.bf16.msra.mxu0 0
    %459 = vmatprep.subr.bf16.mxu0 0
    %460 = vmatpush2.bf16.msra.mxu0 0
    %461 = vmatprep.subr.bf16.mxu0 0
    %462 = vmatpush2.bf16.msra.mxu0 0
    %463 = vmatprep.subr.bf16.mxu0 0
    %464 = vmatpush2.bf16.msra.mxu0 0
    %465 = vmatprep.subr.bf16.mxu0 0
    %466 = vmatpush2.bf16.msra.mxu0 0
    %467 = vmatprep.mubr.bf16.mxu0 0
    %468 = vmatmul.mubr.bf16.gmra.mxu0 %v340
    %v469 = vpop.f32.mrf.mxu0
    %v470 = vadd.f32 0.0, %v469
    %v471 = vpop.f32.mrf.mxu0
    %v472 = vadd.f32 0.0, %v471
    %v473 = vpop.f32.mrf.mxu0
    %v474 = vadd.f32 0.0, %v473
    %v475 = vpop.f32.mrf.mxu0
    %v476 = vadd.f32 0.0, %v475
    %477 = vmatprep.mubr.bf16.mxu0 0
    %478 = vmatmul.mubr.bf16.gmra.mxu0 %v343
    %v479 = vpop.f32.mrf.mxu0
    %v480 = vadd.f32 0.0, %v479
    %v481 = vpop.f32.mrf.mxu0
    %v482 = vadd.f32 0.0, %v481
    %v483 = vpop.f32.mrf.mxu0
    %v484 = vadd.f32 0.0, %v483
    %v485 = vpop.f32.mrf.mxu0
    %v486 = vadd.f32 0.0, %v485
    %487 = vmatprep.mubr.bf16.mxu0 0
    %488 = vmatmul.mubr.bf16.gmra.mxu0 %v346
    %v489 = vpop.f32.mrf.mxu0
    %v490 = vadd.f32 0.0, %v489
    %v491 = vpop.f32.mrf.mxu0
    %v492 = vadd.f32 0.0, %v491
    %v493 = vpop.f32.mrf.mxu0
    %v494 = vadd.f32 0.0, %v493
    %v495 = vpop.f32.mrf.mxu0
    %v496 = vadd.f32 0.0, %v495
    %497 = vmatprep.mubr.bf16.mxu0 0
    %498 = vmatmul.mubr.bf16.gmra.mxu0 %v349
    %v499 = vpop.f32.mrf.mxu0
    %v500 = vadd.f32 0.0, %v499
    %v501 = vpop.f32.mrf.mxu0
    %v502 = vadd.f32 0.0, %v501
    %v503 = vpop.f32.mrf.mxu0
    %v504 = vadd.f32 0.0, %v503
    %v505 = vpop.f32.mrf.mxu0
    %v506 = vadd.f32 0.0, %v505
    %507 = vmatprep.mubr.bf16.mxu0 0
    %508 = vmatmul.mubr.bf16.gmra.mxu0 %v352
    %v509 = vpop.f32.mrf.mxu0
    %v510 = vadd.f32 0.0, %v509
    %v511 = vpop.f32.mrf.mxu0
    %v512 = vadd.f32 0.0, %v511
    %v513 = vpop.f32.mrf.mxu0
    %v514 = vadd.f32 0.0, %v513
    %v515 = vpop.f32.mrf.mxu0
    %v516 = vadd.f32 0.0, %v515
    %517 = vmatprep.mubr.bf16.mxu0 0
    %518 = vmatmul.mubr.bf16.gmra.mxu0 %v355
    %v519 = vpop.f32.mrf.mxu0
    %v520 = vadd.f32 0.0, %v519
    %v521 = vpop.f32.mrf.mxu0
    %v522 = vadd.f32 0.0, %v521
    %v523 = vpop.f32.mrf.mxu0
    %v524 = vadd.f32 0.0, %v523
    %v525 = vpop.f32.mrf.mxu0
    %v526 = vadd.f32 0.0, %v525
    %527 = vmatprep.mubr.bf16.mxu0 0
    %528 = vmatmul.mubr.bf16.gmra.mxu0 %v358
    %v529 = vpop.f32.mrf.mxu0
    %v530 = vadd.f32 0.0, %v529
    %v531 = vpop.f32.mrf.mxu0
    %v532 = vadd.f32 0.0, %v531
    %v533 = vpop.f32.mrf.mxu0
    %v534 = vadd.f32 0.0, %v533
    %v535 = vpop.f32.mrf.mxu0
    %v536 = vadd.f32 0.0, %v535
    %537 = vmatprep.mubr.bf16.mxu0 0
    %538 = vmatmul.mubr.bf16.gmra.mxu0 %v361
    %v539 = vpop.f32.mrf.mxu0
    %v540 = vadd.f32 0.0, %v539
    %v541 = vpop.f32.mrf.mxu0
    %v542 = vadd.f32 0.0, %v541
    %v543 = vpop.f32.mrf.mxu0
    %v544 = vadd.f32 0.0, %v543
    %v545 = vpop.f32.mrf.mxu0
    %v546 = vadd.f32 0.0, %v545
    %547 = vmatprep.mubr.bf16.mxu0 0
    %548 = vmatmul.mubr.bf16.gmra.mxu0 %v364
    %v549 = vpop.f32.mrf.mxu0
    %v550 = vadd.f32 0.0, %v549
    %v551 = vpop.f32.mrf.mxu0
    %v552 = vadd.f32 0.0, %v551
    %v553 = vpop.f32.mrf.mxu0
    %v554 = vadd.f32 0.0, %v553
    %v555 = vpop.f32.mrf.mxu0
    %v556 = vadd.f32 0.0, %v555
    %557 = vmatprep.mubr.bf16.mxu0 0
    %558 = vmatmul.mubr.bf16.gmra.mxu0 %v367
    %v559 = vpop.f32.mrf.mxu0
    %v560 = vadd.f32 0.0, %v559
    %v561 = vpop.f32.mrf.mxu0
    %v562 = vadd.f32 0.0, %v561
    %v563 = vpop.f32.mrf.mxu0
    %v564 = vadd.f32 0.0, %v563
    %v565 = vpop.f32.mrf.mxu0
    %v566 = vadd.f32 0.0, %v565
    %567 = vmatprep.mubr.bf16.mxu0 0
    %568 = vmatmul.mubr.bf16.gmra.mxu0 %v370
    %v569 = vpop.f32.mrf.mxu0
    %v570 = vadd.f32 0.0, %v569
    %v571 = vpop.f32.mrf.mxu0
    %v572 = vadd.f32 0.0, %v571
    %v573 = vpop.f32.mrf.mxu0
    %v574 = vadd.f32 0.0, %v573
    %v575 = vpop.f32.mrf.mxu0
    %v576 = vadd.f32 0.0, %v575
    %577 = vmatprep.mubr.bf16.mxu0 0
    %578 = vmatmul.mubr.bf16.gmra.mxu0 %v373
    %v579 = vpop.f32.mrf.mxu0
    %v580 = vadd.f32 0.0, %v579
    %v581 = vpop.f32.mrf.mxu0
    %v582 = vadd.f32 0.0, %v581
    %v583 = vpop.f32.mrf.mxu0
    %v584 = vadd.f32 0.0, %v583
    %v585 = vpop.f32.mrf.mxu0
    %v586 = vadd.f32 0.0, %v585
    %587 = vmatprep.mubr.bf16.mxu0 0
    %588 = vmatmul.mubr.bf16.gmra.mxu0 %v376
    %v589 = vpop.f32.mrf.mxu0
    %v590 = vadd.f32 0.0, %v589
    %v591 = vpop.f32.mrf.mxu0
    %v592 = vadd.f32 0.0, %v591
    %v593 = vpop.f32.mrf.mxu0
    %v594 = vadd.f32 0.0, %v593
    %v595 = vpop.f32.mrf.mxu0
    %v596 = vadd.f32 0.0, %v595
    %597 = vmatprep.mubr.bf16.mxu0 0
    %598 = vmatmul.mubr.bf16.gmra.mxu0 %v379
    %v599 = vpop.f32.mrf.mxu0
    %v600 = vadd.f32 0.0, %v599
    %v601 = vpop.f32.mrf.mxu0
    %v602 = vadd.f32 0.0, %v601
    %v603 = vpop.f32.mrf.mxu0
    %v604 = vadd.f32 0.0, %v603
    %v605 = vpop.f32.mrf.mxu0
    %v606 = vadd.f32 0.0, %v605
    %607 = vmatprep.mubr.bf16.mxu0 0
    %608 = vmatmul.mubr.bf16.gmra.mxu0 %v382
    %v609 = vpop.f32.mrf.mxu0
    %v610 = vadd.f32 0.0, %v609
    %v611 = vpop.f32.mrf.mxu0
    %v612 = vadd.f32 0.0, %v611
    %v613 = vpop.f32.mrf.mxu0
    %v614 = vadd.f32 0.0, %v613
    %v615 = vpop.f32.mrf.mxu0
    %v616 = vadd.f32 0.0, %v615
    %617 = vmatprep.mubr.bf16.mxu0 0
    %618 = vmatmul.mubr.bf16.gmra.mxu0 %v385
    %v619 = vpop.f32.mrf.mxu0
    %v620 = vadd.f32 0.0, %v619
    %v621 = vpop.f32.mrf.mxu0
    %v622 = vadd.f32 0.0, %v621
    %v623 = vpop.f32.mrf.mxu0
    %v624 = vadd.f32 0.0, %v623
    %v625 = vpop.f32.mrf.mxu0
    %v626 = vadd.f32 0.0, %v625
    %627 = vmatprep.mubr.bf16.mxu0 0
    %628 = vmatmul.mubr.bf16.gmra.mxu0 %v388
    %v629 = vpop.f32.mrf.mxu0
    %v630 = vadd.f32 0.0, %v629
    %v631 = vpop.f32.mrf.mxu0
    %v632 = vadd.f32 0.0, %v631
    %v633 = vpop.f32.mrf.mxu0
    %v634 = vadd.f32 0.0, %v633
    %v635 = vpop.f32.mrf.mxu0
    %v636 = vadd.f32 0.0, %v635
    %637 = vmatprep.mubr.bf16.mxu0 0
    %638 = vmatmul.mubr.bf16.gmra.mxu0 %v391
    %v639 = vpop.f32.mrf.mxu0
    %v640 = vadd.f32 0.0, %v639
    %v641 = vpop.f32.mrf.mxu0
    %v642 = vadd.f32 0.0, %v641
    %v643 = vpop.f32.mrf.mxu0
    %v644 = vadd.f32 0.0, %v643
    %v645 = vpop.f32.mrf.mxu0
    %v646 = vadd.f32 0.0, %v645
    %647 = vmatprep.mubr.bf16.mxu0 0
    %648 = vmatmul.mubr.bf16.gmra.mxu0 %v394
    %v649 = vpop.f32.mrf.mxu0
    %v650 = vadd.f32 0.0, %v649
    %v651 = vpop.f32.mrf.mxu0
    %v652 = vadd.f32 0.0, %v651
    %v653 = vpop.f32.mrf.mxu0
    %v654 = vadd.f32 0.0, %v653
    %v655 = vpop.f32.mrf.mxu0
    %v656 = vadd.f32 0.0, %v655
    %657 = vmatprep.mubr.bf16.mxu0 0
    %658 = vmatmul.mubr.bf16.gmra.mxu0 %v397
    %v659 = vpop.f32.mrf.mxu0
    %v660 = vadd.f32 0.0, %v659
    %v661 = vpop.f32.mrf.mxu0
    %v662 = vadd.f32 0.0, %v661
    %v663 = vpop.f32.mrf.mxu0
    %v664 = vadd.f32 0.0, %v663
    %v665 = vpop.f32.mrf.mxu0
    %v666 = vadd.f32 0.0, %v665
    %667 = vmatprep.mubr.bf16.mxu0 0
    %668 = vmatmul.mubr.bf16.gmra.mxu0 %v400
    %v669 = vpop.f32.mrf.mxu0
    %v670 = vadd.f32 0.0, %v669
    %v671 = vpop.f32.mrf.mxu0
    %v672 = vadd.f32 0.0, %v671
    %v673 = vpop.f32.mrf.mxu0
    %v674 = vadd.f32 0.0, %v673
    %v675 = vpop.f32.mrf.mxu0
    %v676 = vadd.f32 0.0, %v675
    %677 = vmatprep.mubr.bf16.mxu0 0
    %678 = vmatmul.mubr.bf16.gmra.mxu0 %v403
    %v679 = vpop.f32.mrf.mxu0
    %v680 = vadd.f32 0.0, %v679
    %v681 = vpop.f32.mrf.mxu0
    %v682 = vadd.f32 0.0, %v681
    %v683 = vpop.f32.mrf.mxu0
    %v684 = vadd.f32 0.0, %v683
    %v685 = vpop.f32.mrf.mxu0
    %v686 = vadd.f32 0.0, %v685
    %687 = vmatprep.mubr.bf16.mxu0 0
    %688 = vmatmul.mubr.bf16.gmra.mxu0 %v406
    %v689 = vpop.f32.mrf.mxu0
    %v690 = vadd.f32 0.0, %v689
    %v691 = vpop.f32.mrf.mxu0
    %v692 = vadd.f32 0.0, %v691
    %v693 = vpop.f32.mrf.mxu0
    %v694 = vadd.f32 0.0, %v693
    %v695 = vpop.f32.mrf.mxu0
    %v696 = vadd.f32 0.0, %v695
    %697 = vmatprep.mubr.bf16.mxu0 0
    %698 = vmatmul.mubr.bf16.gmra.mxu0 %v409
    %v699 = vpop.f32.mrf.mxu0
    %v700 = vadd.f32 0.0, %v699
    %v701 = vpop.f32.mrf.mxu0
    %v702 = vadd.f32 0.0, %v701
    %v703 = vpop.f32.mrf.mxu0
    %v704 = vadd.f32 0.0, %v703
    %v705 = vpop.f32.mrf.mxu0
    %v706 = vadd.f32 0.0, %v705
    %707 = vmatprep.mubr.bf16.mxu0 0
    %708 = vmatmul.mubr.bf16.gmra.mxu0 %v412
    %v709 = vpop.f32.mrf.mxu0
    %v710 = vadd.f32 0.0, %v709
    %v711 = vpop.f32.mrf.mxu0
    %v712 = vadd.f32 0.0, %v711
    %v713 = vpop.f32.mrf.mxu0
    %v714 = vadd.f32 0.0, %v713
    %v715 = vpop.f32.mrf.mxu0
    %v716 = vadd.f32 0.0, %v715
    %717 = vmatprep.mubr.bf16.mxu0 0
    %718 = vmatmul.mubr.bf16.gmra.mxu0 %v415
    %v719 = vpop.f32.mrf.mxu0
    %v720 = vadd.f32 0.0, %v719
    %v721 = vpop.f32.mrf.mxu0
    %v722 = vadd.f32 0.0, %v721
    %v723 = vpop.f32.mrf.mxu0
    %v724 = vadd.f32 0.0, %v723
    %v725 = vpop.f32.mrf.mxu0
    %v726 = vadd.f32 0.0, %v725
    %727 = vmatprep.mubr.bf16.mxu0 0
    %728 = vmatmul.mubr.bf16.gmra.mxu0 %v418
    %v729 = vpop.f32.mrf.mxu0
    %v730 = vadd.f32 0.0, %v729
    %v731 = vpop.f32.mrf.mxu0
    %v732 = vadd.f32 0.0, %v731
    %v733 = vpop.f32.mrf.mxu0
    %v734 = vadd.f32 0.0, %v733
    %v735 = vpop.f32.mrf.mxu0
    %v736 = vadd.f32 0.0, %v735
    %737 = vmatprep.mubr.bf16.mxu0 0
    %738 = vmatmul.mubr.bf16.gmra.mxu0 %v421
    %v739 = vpop.f32.mrf.mxu0
    %v740 = vadd.f32 0.0, %v739
    %v741 = vpop.f32.mrf.mxu0
    %v742 = vadd.f32 0.0, %v741
    %v743 = vpop.f32.mrf.mxu0
    %v744 = vadd.f32 0.0, %v743
    %v745 = vpop.f32.mrf.mxu0
    %v746 = vadd.f32 0.0, %v745
    %747 = vmatprep.mubr.bf16.mxu0 0
    %748 = vmatmul.mubr.bf16.gmra.mxu0 %v424
    %v749 = vpop.f32.mrf.mxu0
    %v750 = vadd.f32 0.0, %v749
    %v751 = vpop.f32.mrf.mxu0
    %v752 = vadd.f32 0.0, %v751
    %v753 = vpop.f32.mrf.mxu0
    %v754 = vadd.f32 0.0, %v753
    %v755 = vpop.f32.mrf.mxu0
    %v756 = vadd.f32 0.0, %v755
    %757 = vmatprep.mubr.bf16.mxu0 0
    %758 = vmatmul.mubr.bf16.gmra.mxu0 %v427
    %v759 = vpop.f32.mrf.mxu0
    %v760 = vadd.f32 0.0, %v759
    %v761 = vpop.f32.mrf.mxu0
    %v762 = vadd.f32 0.0, %v761
    %v763 = vpop.f32.mrf.mxu0
    %v764 = vadd.f32 0.0, %v763
    %v765 = vpop.f32.mrf.mxu0
    %v766 = vadd.f32 0.0, %v765
    %767 = vmatprep.mubr.bf16.mxu0 0
    %768 = vmatmul.mubr.bf16.gmra.mxu0 %v430
    %v769 = vpop.f32.mrf.mxu0
    %v770 = vadd.f32 0.0, %v769
    %v771 = vpop.f32.mrf.mxu0
    %v772 = vadd.f32 0.0, %v771
    %v773 = vpop.f32.mrf.mxu0
    %v774 = vadd.f32 0.0, %v773
    %v775 = vpop.f32.mrf.mxu0
    %v776 = vadd.f32 0.0, %v775
    %777 = vmatprep.mubr.bf16.mxu0 0
    %778 = vmatmul.mubr.bf16.gmra.mxu0 %v433
    %v779 = vpop.f32.mrf.mxu0
    %v780 = vadd.f32 0.0, %v779
    %v781 = vpop.f32.mrf.mxu0
    %v782 = vadd.f32 0.0, %v781
    %v783 = vpop.f32.mrf.mxu0
    %v784 = vadd.f32 0.0, %v783
    %v785 = vpop.f32.mrf.mxu0
    %v786 = vadd.f32 0.0, %v785
    %787 = vdwg.mxu0
    %788 = vmatprep.subr.bf16.mxu0 0
    %789 = vmatpush1.bf16.msra.mxu0 0
    %790 = vmatprep.subr.bf16.mxu0 0
    %791 = vmatpush1.bf16.msra.mxu0 0
    %792 = vmatprep.subr.bf16.mxu0 0
    %793 = vmatpush1.bf16.msra.mxu0 0
    %794 = vmatprep.subr.bf16.mxu0 0
    %795 = vmatpush1.bf16.msra.mxu0 0
    %796 = vmatprep.subr.bf16.mxu0 %v321
    %797 = vmatpush1.bf16.msra.mxu0 %v320
    %798 = vmatprep.subr.bf16.mxu0 %v317
    %799 = vmatpush1.bf16.msra.mxu0 %v316
    %800 = vmatprep.subr.bf16.mxu0 %v313
    %801 = vmatpush1.bf16.msra.mxu0 %v312
    %802 = vmatprep.subr.bf16.mxu0 %v309
    %803 = vmatpush1.bf16.msra.mxu0 %v308
    %804 = vmatprep.subr.bf16.mxu0 0
    %805 = vmatpush2.bf16.msra.mxu0 0
    %806 = vmatprep.subr.bf16.mxu0 0
    %807 = vmatpush2.bf16.msra.mxu0 0
    %808 = vmatprep.subr.bf16.mxu0 0
    %809 = vmatpush2.bf16.msra.mxu0 0
    %810 = vmatprep.subr.bf16.mxu0 0
    %811 = vmatpush2.bf16.msra.mxu0 0
    %812 = vmatprep.subr.bf16.mxu0 0
    %813 = vmatpush2.bf16.msra.mxu0 0
    %814 = vmatprep.subr.bf16.mxu0 0
    %815 = vmatpush2.bf16.msra.mxu0 0
    %816 = vmatprep.subr.bf16.mxu0 0
    %817 = vmatpush2.bf16.msra.mxu0 0
    %818 = vmatprep.subr.bf16.mxu0 0
    %819 = vmatpush2.bf16.msra.mxu0 0
    %820 = vmatprep.mubr.bf16.mxu0 0
    %821 = vmatmul.mubr.bf16.gmra.mxu0 %v340
    %v822 = vpop.f32.mrf.mxu0
    %v823 = vadd.f32 0.0, %v822
    %v824 = vpop.f32.mrf.mxu0
    %v825 = vadd.f32 0.0, %v824
    %v826 = vpop.f32.mrf.mxu0
    %v827 = vadd.f32 0.0, %v826
    %v828 = vpop.f32.mrf.mxu0
    %v829 = vadd.f32 0.0, %v828
    %830 = vmatprep.mubr.bf16.mxu0 0
    %831 = vmatmul.mubr.bf16.gmra.mxu0 %v343
    %v832 = vpop.f32.mrf.mxu0
    %v833 = vadd.f32 0.0, %v832
    %v834 = vpop.f32.mrf.mxu0
    %v835 = vadd.f32 0.0, %v834
    %v836 = vpop.f32.mrf.mxu0
    %v837 = vadd.f32 0.0, %v836
    %v838 = vpop.f32.mrf.mxu0
    %v839 = vadd.f32 0.0, %v838
    %840 = vmatprep.mubr.bf16.mxu0 0
    %841 = vmatmul.mubr.bf16.gmra.mxu0 %v346
    %v842 = vpop.f32.mrf.mxu0
    %v843 = vadd.f32 0.0, %v842
    %v844 = vpop.f32.mrf.mxu0
    %v845 = vadd.f32 0.0, %v844
    %v846 = vpop.f32.mrf.mxu0
    %v847 = vadd.f32 0.0, %v846
    %v848 = vpop.f32.mrf.mxu0
    %v849 = vadd.f32 0.0, %v848
    %850 = vmatprep.mubr.bf16.mxu0 0
    %851 = vmatmul.mubr.bf16.gmra.mxu0 %v349
    %v852 = vpop.f32.mrf.mxu0
    %v853 = vadd.f32 0.0, %v852
    %v854 = vpop.f32.mrf.mxu0
    %v855 = vadd.f32 0.0, %v854
    %v856 = vpop.f32.mrf.mxu0
    %v857 = vadd.f32 0.0, %v856
    %v858 = vpop.f32.mrf.mxu0
    %v859 = vadd.f32 0.0, %v858
    %860 = vmatprep.mubr.bf16.mxu0 0
    %861 = vmatmul.mubr.bf16.gmra.mxu0 %v352
    %v862 = vpop.f32.mrf.mxu0
    %v863 = vadd.f32 0.0, %v862
    %v864 = vpop.f32.mrf.mxu0
    %v865 = vadd.f32 0.0, %v864
    %v866 = vpop.f32.mrf.mxu0
    %v867 = vadd.f32 0.0, %v866
    %v868 = vpop.f32.mrf.mxu0
    %v869 = vadd.f32 0.0, %v868
    %870 = vmatprep.mubr.bf16.mxu0 0
    %871 = vmatmul.mubr.bf16.gmra.mxu0 %v355
    %v872 = vpop.f32.mrf.mxu0
    %v873 = vadd.f32 0.0, %v872
    %v874 = vpop.f32.mrf.mxu0
    %v875 = vadd.f32 0.0, %v874
    %v876 = vpop.f32.mrf.mxu0
    %v877 = vadd.f32 0.0, %v876
    %v878 = vpop.f32.mrf.mxu0
    %v879 = vadd.f32 0.0, %v878
    %880 = vmatprep.mubr.bf16.mxu0 0
    %881 = vmatmul.mubr.bf16.gmra.mxu0 %v358
    %v882 = vpop.f32.mrf.mxu0
    %v883 = vadd.f32 0.0, %v882
    %v884 = vpop.f32.mrf.mxu0
    %v885 = vadd.f32 0.0, %v884
    %v886 = vpop.f32.mrf.mxu0
    %v887 = vadd.f32 0.0, %v886
    %v888 = vpop.f32.mrf.mxu0
    %v889 = vadd.f32 0.0, %v888
    %890 = vmatprep.mubr.bf16.mxu0 0
    %891 = vmatmul.mubr.bf16.gmra.mxu0 %v361
    %v892 = vpop.f32.mrf.mxu0
    %v893 = vadd.f32 0.0, %v892
    %v894 = vpop.f32.mrf.mxu0
    %v895 = vadd.f32 0.0, %v894
    %v896 = vpop.f32.mrf.mxu0
    %v897 = vadd.f32 0.0, %v896
    %v898 = vpop.f32.mrf.mxu0
    %v899 = vadd.f32 0.0, %v898
    %900 = vmatprep.mubr.bf16.mxu0 0
    %901 = vmatmul.mubr.bf16.gmra.mxu0 %v364
    %v902 = vpop.f32.mrf.mxu0
    %v903 = vadd.f32 0.0, %v902
    %v904 = vpop.f32.mrf.mxu0
    %v905 = vadd.f32 0.0, %v904
    %v906 = vpop.f32.mrf.mxu0
    %v907 = vadd.f32 0.0, %v906
    %v908 = vpop.f32.mrf.mxu0
    %v909 = vadd.f32 0.0, %v908
    %910 = vmatprep.mubr.bf16.mxu0 0
    %911 = vmatmul.mubr.bf16.gmra.mxu0 %v367
    %v912 = vpop.f32.mrf.mxu0
    %v913 = vadd.f32 0.0, %v912
    %v914 = vpop.f32.mrf.mxu0
    %v915 = vadd.f32 0.0, %v914
    %v916 = vpop.f32.mrf.mxu0
    %v917 = vadd.f32 0.0, %v916
    %v918 = vpop.f32.mrf.mxu0
    %v919 = vadd.f32 0.0, %v918
    %920 = vmatprep.mubr.bf16.mxu0 0
    %921 = vmatmul.mubr.bf16.gmra.mxu0 %v370
    %v922 = vpop.f32.mrf.mxu0
    %v923 = vadd.f32 0.0, %v922
    %v924 = vpop.f32.mrf.mxu0
    %v925 = vadd.f32 0.0, %v924
    %v926 = vpop.f32.mrf.mxu0
    %v927 = vadd.f32 0.0, %v926
    %v928 = vpop.f32.mrf.mxu0
    %v929 = vadd.f32 0.0, %v928
    %930 = vmatprep.mubr.bf16.mxu0 0
    %931 = vmatmul.mubr.bf16.gmra.mxu0 %v373
    %v932 = vpop.f32.mrf.mxu0
    %v933 = vadd.f32 0.0, %v932
    %v934 = vpop.f32.mrf.mxu0
    %v935 = vadd.f32 0.0, %v934
    %v936 = vpop.f32.mrf.mxu0
    %v937 = vadd.f32 0.0, %v936
    %v938 = vpop.f32.mrf.mxu0
    %v939 = vadd.f32 0.0, %v938
    %940 = vmatprep.mubr.bf16.mxu0 0
    %941 = vmatmul.mubr.bf16.gmra.mxu0 %v376
    %v942 = vpop.f32.mrf.mxu0
    %v943 = vadd.f32 0.0, %v942
    %v944 = vpop.f32.mrf.mxu0
    %v945 = vadd.f32 0.0, %v944
    %v946 = vpop.f32.mrf.mxu0
    %v947 = vadd.f32 0.0, %v946
    %v948 = vpop.f32.mrf.mxu0
    %v949 = vadd.f32 0.0, %v948
    %950 = vmatprep.mubr.bf16.mxu0 0
    %951 = vmatmul.mubr.bf16.gmra.mxu0 %v379
    %v952 = vpop.f32.mrf.mxu0
    %v953 = vadd.f32 0.0, %v952
    %v954 = vpop.f32.mrf.mxu0
    %v955 = vadd.f32 0.0, %v954
    %v956 = vpop.f32.mrf.mxu0
    %v957 = vadd.f32 0.0, %v956
    %v958 = vpop.f32.mrf.mxu0
    %v959 = vadd.f32 0.0, %v958
    %960 = vmatprep.mubr.bf16.mxu0 0
    %961 = vmatmul.mubr.bf16.gmra.mxu0 %v382
    %v962 = vpop.f32.mrf.mxu0
    %v963 = vadd.f32 0.0, %v962
    %v964 = vpop.f32.mrf.mxu0
    %v965 = vadd.f32 0.0, %v964
    %v966 = vpop.f32.mrf.mxu0
    %v967 = vadd.f32 0.0, %v966
    %v968 = vpop.f32.mrf.mxu0
    %v969 = vadd.f32 0.0, %v968
    %970 = vmatprep.mubr.bf16.mxu0 0
    %971 = vmatmul.mubr.bf16.gmra.mxu0 %v385
    %v972 = vpop.f32.mrf.mxu0
    %v973 = vadd.f32 0.0, %v972
    %v974 = vpop.f32.mrf.mxu0
    %v975 = vadd.f32 0.0, %v974
    %v976 = vpop.f32.mrf.mxu0
    %v977 = vadd.f32 0.0, %v976
    %v978 = vpop.f32.mrf.mxu0
    %v979 = vadd.f32 0.0, %v978
    %980 = vmatprep.mubr.bf16.mxu0 0
    %981 = vmatmul.mubr.bf16.gmra.mxu0 %v388
    %v982 = vpop.f32.mrf.mxu0
    %v983 = vadd.f32 0.0, %v982
    %v984 = vpop.f32.mrf.mxu0
    %v985 = vadd.f32 0.0, %v984
    %v986 = vpop.f32.mrf.mxu0
    %v987 = vadd.f32 0.0, %v986
    %v988 = vpop.f32.mrf.mxu0
    %v989 = vadd.f32 0.0, %v988
    %990 = vmatprep.mubr.bf16.mxu0 0
    %991 = vmatmul.mubr.bf16.gmra.mxu0 %v391
    %v992 = vpop.f32.mrf.mxu0
    %v993 = vadd.f32 0.0, %v992
    %v994 = vpop.f32.mrf.mxu0
    %v995 = vadd.f32 0.0, %v994
    %v996 = vpop.f32.mrf.mxu0
    %v997 = vadd.f32 0.0, %v996
    %v998 = vpop.f32.mrf.mxu0
    %v999 = vadd.f32 0.0, %v998
    %1000 = vmatprep.mubr.bf16.mxu0 0
    %1001 = vmatmul.mubr.bf16.gmra.mxu0 %v394
    %v1002 = vpop.f32.mrf.mxu0
    %v1003 = vadd.f32 0.0, %v1002
    %v1004 = vpop.f32.mrf.mxu0
    %v1005 = vadd.f32 0.0, %v1004
    %v1006 = vpop.f32.mrf.mxu0
    %v1007 = vadd.f32 0.0, %v1006
    %v1008 = vpop.f32.mrf.mxu0
    %v1009 = vadd.f32 0.0, %v1008
    %1010 = vmatprep.mubr.bf16.mxu0 0
    %1011 = vmatmul.mubr.bf16.gmra.mxu0 %v397
    %v1012 = vpop.f32.mrf.mxu0
    %v1013 = vadd.f32 0.0, %v1012
    %v1014 = vpop.f32.mrf.mxu0
    %v1015 = vadd.f32 0.0, %v1014
    %v1016 = vpop.f32.mrf.mxu0
    %v1017 = vadd.f32 0.0, %v1016
    %v1018 = vpop.f32.mrf.mxu0
    %v1019 = vadd.f32 0.0, %v1018
    %1020 = vmatprep.mubr.bf16.mxu0 0
    %1021 = vmatmul.mubr.bf16.gmra.mxu0 %v400
    %v1022 = vpop.f32.mrf.mxu0
    %v1023 = vadd.f32 0.0, %v1022
    %v1024 = vpop.f32.mrf.mxu0
    %v1025 = vadd.f32 0.0, %v1024
    %v1026 = vpop.f32.mrf.mxu0
    %v1027 = vadd.f32 0.0, %v1026
    %v1028 = vpop.f32.mrf.mxu0
    %v1029 = vadd.f32 0.0, %v1028
    %1030 = vmatprep.mubr.bf16.mxu0 0
    %1031 = vmatmul.mubr.bf16.gmra.mxu0 %v403
    %v1032 = vpop.f32.mrf.mxu0
    %v1033 = vadd.f32 0.0, %v1032
    %v1034 = vpop.f32.mrf.mxu0
    %v1035 = vadd.f32 0.0, %v1034
    %v1036 = vpop.f32.mrf.mxu0
    %v1037 = vadd.f32 0.0, %v1036
    %v1038 = vpop.f32.mrf.mxu0
    %v1039 = vadd.f32 0.0, %v1038
    %1040 = vmatprep.mubr.bf16.mxu0 0
    %1041 = vmatmul.mubr.bf16.gmra.mxu0 %v406
    %v1042 = vpop.f32.mrf.mxu0
    %v1043 = vadd.f32 0.0, %v1042
    %v1044 = vpop.f32.mrf.mxu0
    %v1045 = vadd.f32 0.0, %v1044
    %v1046 = vpop.f32.mrf.mxu0
    %v1047 = vadd.f32 0.0, %v1046
    %v1048 = vpop.f32.mrf.mxu0
    %v1049 = vadd.f32 0.0, %v1048
    %1050 = vmatprep.mubr.bf16.mxu0 0
    %1051 = vmatmul.mubr.bf16.gmra.mxu0 %v409
    %v1052 = vpop.f32.mrf.mxu0
    %v1053 = vadd.f32 0.0, %v1052
    %v1054 = vpop.f32.mrf.mxu0
    %v1055 = vadd.f32 0.0, %v1054
    %v1056 = vpop.f32.mrf.mxu0
    %v1057 = vadd.f32 0.0, %v1056
    %v1058 = vpop.f32.mrf.mxu0
    %v1059 = vadd.f32 0.0, %v1058
    %1060 = vmatprep.mubr.bf16.mxu0 0
    %1061 = vmatmul.mubr.bf16.gmra.mxu0 %v412
    %v1062 = vpop.f32.mrf.mxu0
    %v1063 = vadd.f32 0.0, %v1062
    %v1064 = vpop.f32.mrf.mxu0
    %v1065 = vadd.f32 0.0, %v1064
    %v1066 = vpop.f32.mrf.mxu0
    %v1067 = vadd.f32 0.0, %v1066
    %v1068 = vpop.f32.mrf.mxu0
    %v1069 = vadd.f32 0.0, %v1068
    %1070 = vmatprep.mubr.bf16.mxu0 0
    %1071 = vmatmul.mubr.bf16.gmra.mxu0 %v415
    %v1072 = vpop.f32.mrf.mxu0
    %v1073 = vadd.f32 0.0, %v1072
    %v1074 = vpop.f32.mrf.mxu0
    %v1075 = vadd.f32 0.0, %v1074
    %v1076 = vpop.f32.mrf.mxu0
    %v1077 = vadd.f32 0.0, %v1076
    %v1078 = vpop.f32.mrf.mxu0
    %v1079 = vadd.f32 0.0, %v1078
    %1080 = vmatprep.mubr.bf16.mxu0 0
    %1081 = vmatmul.mubr.bf16.gmra.mxu0 %v418
    %v1082 = vpop.f32.mrf.mxu0
    %v1083 = vadd.f32 0.0, %v1082
    %v1084 = vpop.f32.mrf.mxu0
    %v1085 = vadd.f32 0.0, %v1084
    %v1086 = vpop.f32.mrf.mxu0
    %v1087 = vadd.f32 0.0, %v1086
    %v1088 = vpop.f32.mrf.mxu0
    %v1089 = vadd.f32 0.0, %v1088
    %1090 = vmatprep.mubr.bf16.mxu0 0
    %1091 = vmatmul.mubr.bf16.gmra.mxu0 %v421
    %v1092 = vpop.f32.mrf.mxu0
    %v1093 = vadd.f32 0.0, %v1092
    %v1094 = vpop.f32.mrf.mxu0
    %v1095 = vadd.f32 0.0, %v1094
    %v1096 = vpop.f32.mrf.mxu0
    %v1097 = vadd.f32 0.0, %v1096
    %v1098 = vpop.f32.mrf.mxu0
    %v1099 = vadd.f32 0.0, %v1098
    %1100 = vmatprep.mubr.bf16.mxu0 0
    %1101 = vmatmul.mubr.bf16.gmra.mxu0 %v424
    %v1102 = vpop.f32.mrf.mxu0
    %v1103 = vadd.f32 0.0, %v1102
    %v1104 = vpop.f32.mrf.mxu0
    %v1105 = vadd.f32 0.0, %v1104
    %v1106 = vpop.f32.mrf.mxu0
    %v1107 = vadd.f32 0.0, %v1106
    %v1108 = vpop.f32.mrf.mxu0
    %v1109 = vadd.f32 0.0, %v1108
    %1110 = vmatprep.mubr.bf16.mxu0 0
    %1111 = vmatmul.mubr.bf16.gmra.mxu0 %v427
    %v1112 = vpop.f32.mrf.mxu0
    %v1113 = vadd.f32 0.0, %v1112
    %v1114 = vpop.f32.mrf.mxu0
    %v1115 = vadd.f32 0.0, %v1114
    %v1116 = vpop.f32.mrf.mxu0
    %v1117 = vadd.f32 0.0, %v1116
    %v1118 = vpop.f32.mrf.mxu0
    %v1119 = vadd.f32 0.0, %v1118
    %1120 = vmatprep.mubr.bf16.mxu0 0
    %1121 = vmatmul.mubr.bf16.gmra.mxu0 %v430
    %v1122 = vpop.f32.mrf.mxu0
    %v1123 = vadd.f32 0.0, %v1122
    %v1124 = vpop.f32.mrf.mxu0
    %v1125 = vadd.f32 0.0, %v1124
    %v1126 = vpop.f32.mrf.mxu0
    %v1127 = vadd.f32 0.0, %v1126
    %v1128 = vpop.f32.mrf.mxu0
    %v1129 = vadd.f32 0.0, %v1128
    %1130 = vmatprep.mubr.bf16.mxu0 0
    %1131 = vmatmul.mubr.bf16.gmra.mxu0 %v433
    %v1132 = vpop.f32.mrf.mxu0
    %v1133 = vadd.f32 0.0, %v1132
    %v1134 = vpop.f32.mrf.mxu0
    %v1135 = vadd.f32 0.0, %v1134
    %v1136 = vpop.f32.mrf.mxu0
    %v1137 = vadd.f32 0.0, %v1136
    %v1138 = vpop.f32.mrf.mxu0
    %v1139 = vadd.f32 0.0, %v1138
    %1140 = vdwg.mxu0
    %v1141 = vpack.c.bf16 %v474, %v470
    %v1142 = vpack.c.bf16 %v476, %v472
    %v1143 = vpack.c.bf16 %v827, %v823
    %v1144 = vpack.c.bf16 %v829, %v825
    %v1145 = vpack.c.bf16 %v484, %v480
    %v1146 = vpack.c.bf16 %v486, %v482
    %v1147 = vpack.c.bf16 %v837, %v833
    %v1148 = vpack.c.bf16 %v839, %v835
    %v1149 = vpack.c.bf16 %v494, %v490
    %v1150 = vpack.c.bf16 %v496, %v492
    %v1151 = vpack.c.bf16 %v847, %v843
    %v1152 = vpack.c.bf16 %v849, %v845
    %v1153 = vpack.c.bf16 %v504, %v500
    %v1154 = vpack.c.bf16 %v506, %v502
    %v1155 = vpack.c.bf16 %v857, %v853
    %v1156 = vpack.c.bf16 %v859, %v855
    %v1157 = vpack.c.bf16 %v514, %v510
    %v1158 = vpack.c.bf16 %v516, %v512
    %v1159 = vpack.c.bf16 %v867, %v863
    %v1160 = vpack.c.bf16 %v869, %v865
    %v1161 = vpack.c.bf16 %v524, %v520
    %v1162 = vpack.c.bf16 %v526, %v522
    %v1163 = vpack.c.bf16 %v877, %v873
    %v1164 = vpack.c.bf16 %v879, %v875
    %v1165 = vpack.c.bf16 %v534, %v530
    %v1166 = vpack.c.bf16 %v536, %v532
    %v1167 = vpack.c.bf16 %v887, %v883
    %v1168 = vpack.c.bf16 %v889, %v885
    %v1169 = vpack.c.bf16 %v544, %v540
    %v1170 = vpack.c.bf16 %v546, %v542
    %v1171 = vpack.c.bf16 %v897, %v893
    %v1172 = vpack.c.bf16 %v899, %v895
    %v1173 = vpack.c.bf16 %v554, %v550
    %v1174 = vpack.c.bf16 %v556, %v552
    %v1175 = vpack.c.bf16 %v907, %v903
    %v1176 = vpack.c.bf16 %v909, %v905
    %v1177 = vpack.c.bf16 %v564, %v560
    %v1178 = vpack.c.bf16 %v566, %v562
    %v1179 = vpack.c.bf16 %v917, %v913
    %v1180 = vpack.c.bf16 %v919, %v915
    %v1181 = vpack.c.bf16 %v574, %v570
    %v1182 = vpack.c.bf16 %v576, %v572
    %v1183 = vpack.c.bf16 %v927, %v923
    %v1184 = vpack.c.bf16 %v929, %v925
    %v1185 = vpack.c.bf16 %v584, %v580
    %v1186 = vpack.c.bf16 %v586, %v582
    %v1187 = vpack.c.bf16 %v937, %v933
    %v1188 = vpack.c.bf16 %v939, %v935
    %v1189 = vpack.c.bf16 %v594, %v590
    %v1190 = vpack.c.bf16 %v596, %v592
    %v1191 = vpack.c.bf16 %v947, %v943
    %v1192 = vpack.c.bf16 %v949, %v945
    %v1193 = vpack.c.bf16 %v604, %v600
    %v1194 = vpack.c.bf16 %v606, %v602
    %v1195 = vpack.c.bf16 %v957, %v953
    %v1196 = vpack.c.bf16 %v959, %v955
    %v1197 = vpack.c.bf16 %v614, %v610
    %v1198 = vpack.c.bf16 %v616, %v612
    %v1199 = vpack.c.bf16 %v967, %v963
    %v1200 = vpack.c.bf16 %v969, %v965
    %v1201 = vpack.c.bf16 %v624, %v620
    %v1202 = vpack.c.bf16 %v626, %v622
    %v1203 = vpack.c.bf16 %v977, %v973
    %v1204 = vpack.c.bf16 %v979, %v975
    %v1205 = vpack.c.bf16 %v634, %v630
    %v1206 = vpack.c.bf16 %v636, %v632
    %v1207 = vpack.c.bf16 %v987, %v983
    %v1208 = vpack.c.bf16 %v989, %v985
    %v1209 = vpack.c.bf16 %v644, %v640
    %v1210 = vpack.c.bf16 %v646, %v642
    %v1211 = vpack.c.bf16 %v997, %v993
    %v1212 = vpack.c.bf16 %v999, %v995
    %v1213 = vpack.c.bf16 %v654, %v650
    %v1214 = vpack.c.bf16 %v656, %v652
    %v1215 = vpack.c.bf16 %v1007, %v1003
    %v1216 = vpack.c.bf16 %v1009, %v1005
    %v1217 = vpack.c.bf16 %v664, %v660
    %v1218 = vpack.c.bf16 %v666, %v662
    %v1219 = vpack.c.bf16 %v1017, %v1013
    %v1220 = vpack.c.bf16 %v1019, %v1015
    %v1221 = vpack.c.bf16 %v674, %v670
    %v1222 = vpack.c.bf16 %v676, %v672
    %v1223 = vpack.c.bf16 %v1027, %v1023
    %v1224 = vpack.c.bf16 %v1029, %v1025
    %v1225 = vpack.c.bf16 %v684, %v680
    %v1226 = vpack.c.bf16 %v686, %v682
    %v1227 = vpack.c.bf16 %v1037, %v1033
    %v1228 = vpack.c.bf16 %v1039, %v1035
    %v1229 = vpack.c.bf16 %v694, %v690
    %v1230 = vpack.c.bf16 %v696, %v692
    %v1231 = vpack.c.bf16 %v1047, %v1043
    %v1232 = vpack.c.bf16 %v1049, %v1045
    %v1233 = vpack.c.bf16 %v704, %v700
    %v1234 = vpack.c.bf16 %v706, %v702
    %v1235 = vpack.c.bf16 %v1057, %v1053
    %v1236 = vpack.c.bf16 %v1059, %v1055
    %v1237 = vpack.c.bf16 %v714, %v710
    %v1238 = vpack.c.bf16 %v716, %v712
    %v1239 = vpack.c.bf16 %v1067, %v1063
    %v1240 = vpack.c.bf16 %v1069, %v1065
    %v1241 = vpack.c.bf16 %v724, %v720
    %v1242 = vpack.c.bf16 %v726, %v722
    %v1243 = vpack.c.bf16 %v1077, %v1073
    %v1244 = vpack.c.bf16 %v1079, %v1075
    %v1245 = vpack.c.bf16 %v734, %v730
    %v1246 = vpack.c.bf16 %v736, %v732
    %v1247 = vpack.c.bf16 %v1087, %v1083
    %v1248 = vpack.c.bf16 %v1089, %v1085
    %v1249 = vpack.c.bf16 %v744, %v740
    %v1250 = vpack.c.bf16 %v746, %v742
    %v1251 = vpack.c.bf16 %v1097, %v1093
    %v1252 = vpack.c.bf16 %v1099, %v1095
    %v1253 = vpack.c.bf16 %v754, %v750
    %v1254 = vpack.c.bf16 %v756, %v752
    %v1255 = vpack.c.bf16 %v1107, %v1103
    %v1256 = vpack.c.bf16 %v1109, %v1105
    %v1257 = vpack.c.bf16 %v764, %v760
    %v1258 = vpack.c.bf16 %v766, %v762
    %v1259 = vpack.c.bf16 %v1117, %v1113
    %v1260 = vpack.c.bf16 %v1119, %v1115
    %v1261 = vpack.c.bf16 %v774, %v770
    %v1262 = vpack.c.bf16 %v776, %v772
    %v1263 = vpack.c.bf16 %v1127, %v1123
    %v1264 = vpack.c.bf16 %v1129, %v1125
    %v1265 = vpack.c.bf16 %v784, %v780
    %v1266 = vpack.c.bf16 %v786, %v782
    %v1267 = vpack.c.bf16 %v1137, %v1133
    %v1268 = vpack.c.bf16 %v1139, %v1135
    %v1397 = vunpack.c.l.b16 %v1141
    %v1398 = vunpack.c.l.b16 %v1142
    %v1399 = vunpack.c.l.b16 %v1143
    %v1400 = vunpack.c.l.b16 %v1144
    %v1401 = vunpack.c.h.b16 %v1141
    %v1402 = vunpack.c.h.b16 %v1142
    %v1403 = vunpack.c.h.b16 %v1143
    %v1404 = vunpack.c.h.b16 %v1144
    %v1405 = vunpack.c.l.b16 %v1145
    %v1406 = vunpack.c.l.b16 %v1146
    %v1407 = vunpack.c.l.b16 %v1147
    %v1408 = vunpack.c.l.b16 %v1148
    %v1409 = vunpack.c.h.b16 %v1145
    %v1410 = vunpack.c.h.b16 %v1146
    %v1411 = vunpack.c.h.b16 %v1147
    %v1412 = vunpack.c.h.b16 %v1148
    %v1413 = vunpack.c.l.b16 %v1149
    %v1414 = vunpack.c.l.b16 %v1150
    %v1415 = vunpack.c.l.b16 %v1151
    %v1416 = vunpack.c.l.b16 %v1152
    %v1417 = vunpack.c.h.b16 %v1149
    %v1418 = vunpack.c.h.b16 %v1150
    %v1419 = vunpack.c.h.b16 %v1151
    %v1420 = vunpack.c.h.b16 %v1152
    %v1421 = vunpack.c.l.b16 %v1153
    %v1422 = vunpack.c.l.b16 %v1154
    %v1423 = vunpack.c.l.b16 %v1155
    %v1424 = vunpack.c.l.b16 %v1156
    %v1425 = vunpack.c.h.b16 %v1153
    %v1426 = vunpack.c.h.b16 %v1154
    %v1427 = vunpack.c.h.b16 %v1155
    %v1428 = vunpack.c.h.b16 %v1156
    %v1429 = vunpack.c.l.b16 %v1157
    %v1430 = vunpack.c.l.b16 %v1158
    %v1431 = vunpack.c.l.b16 %v1159
    %v1432 = vunpack.c.l.b16 %v1160
    %v1433 = vunpack.c.h.b16 %v1157
    %v1434 = vunpack.c.h.b16 %v1158
    %v1435 = vunpack.c.h.b16 %v1159
    %v1436 = vunpack.c.h.b16 %v1160
    %v1437 = vunpack.c.l.b16 %v1161
    %v1438 = vunpack.c.l.b16 %v1162
    %v1439 = vunpack.c.l.b16 %v1163
    %v1440 = vunpack.c.l.b16 %v1164
    %v1441 = vunpack.c.h.b16 %v1161
    %v1442 = vunpack.c.h.b16 %v1162
    %v1443 = vunpack.c.h.b16 %v1163
    %v1444 = vunpack.c.h.b16 %v1164
    %v1445 = vunpack.c.l.b16 %v1165
    %v1446 = vunpack.c.l.b16 %v1166
    %v1447 = vunpack.c.l.b16 %v1167
    %v1448 = vunpack.c.l.b16 %v1168
    %v1449 = vunpack.c.h.b16 %v1165
    %v1450 = vunpack.c.h.b16 %v1166
    %v1451 = vunpack.c.h.b16 %v1167
    %v1452 = vunpack.c.h.b16 %v1168
    %v1453 = vunpack.c.l.b16 %v1169
    %v1454 = vunpack.c.l.b16 %v1170
    %v1455 = vunpack.c.l.b16 %v1171
    %v1456 = vunpack.c.l.b16 %v1172
    %v1457 = vunpack.c.h.b16 %v1169
    %v1458 = vunpack.c.h.b16 %v1170
    %v1459 = vunpack.c.h.b16 %v1171
    %v1460 = vunpack.c.h.b16 %v1172
    %v1461 = vunpack.c.l.b16 %v1173
    %v1462 = vunpack.c.l.b16 %v1174
    %v1463 = vunpack.c.l.b16 %v1175
    %v1464 = vunpack.c.l.b16 %v1176
    %v1465 = vunpack.c.h.b16 %v1173
    %v1466 = vunpack.c.h.b16 %v1174
    %v1467 = vunpack.c.h.b16 %v1175
    %v1468 = vunpack.c.h.b16 %v1176
    %v1469 = vunpack.c.l.b16 %v1177
    %v1470 = vunpack.c.l.b16 %v1178
    %v1471 = vunpack.c.l.b16 %v1179
    %v1472 = vunpack.c.l.b16 %v1180
    %v1473 = vunpack.c.h.b16 %v1177
    %v1474 = vunpack.c.h.b16 %v1178
    %v1475 = vunpack.c.h.b16 %v1179
    %v1476 = vunpack.c.h.b16 %v1180
    %v1477 = vunpack.c.l.b16 %v1181
    %v1478 = vunpack.c.l.b16 %v1182
    %v1479 = vunpack.c.l.b16 %v1183
    %v1480 = vunpack.c.l.b16 %v1184
    %v1481 = vunpack.c.h.b16 %v1181
    %v1482 = vunpack.c.h.b16 %v1182
    %v1483 = vunpack.c.h.b16 %v1183
    %v1484 = vunpack.c.h.b16 %v1184
    %v1485 = vunpack.c.l.b16 %v1185
    %v1486 = vunpack.c.l.b16 %v1186
    %v1487 = vunpack.c.l.b16 %v1187
    %v1488 = vunpack.c.l.b16 %v1188
    %v1489 = vunpack.c.h.b16 %v1185
    %v1490 = vunpack.c.h.b16 %v1186
    %v1491 = vunpack.c.h.b16 %v1187
    %v1492 = vunpack.c.h.b16 %v1188
    %v1493 = vunpack.c.l.b16 %v1189
    %v1494 = vunpack.c.l.b16 %v1190
    %v1495 = vunpack.c.l.b16 %v1191
    %v1496 = vunpack.c.l.b16 %v1192
    %v1497 = vunpack.c.h.b16 %v1189
    %v1498 = vunpack.c.h.b16 %v1190
    %v1499 = vunpack.c.h.b16 %v1191
    %v1500 = vunpack.c.h.b16 %v1192
    %v1501 = vunpack.c.l.b16 %v1193
    %v1502 = vunpack.c.l.b16 %v1194
    %v1503 = vunpack.c.l.b16 %v1195
    %v1504 = vunpack.c.l.b16 %v1196
    %v1505 = vunpack.c.h.b16 %v1193
    %v1506 = vunpack.c.h.b16 %v1194
    %v1507 = vunpack.c.h.b16 %v1195
    %v1508 = vunpack.c.h.b16 %v1196
    %v1509 = vunpack.c.l.b16 %v1197
    %v1510 = vunpack.c.l.b16 %v1198
    %v1511 = vunpack.c.l.b16 %v1199
    %v1512 = vunpack.c.l.b16 %v1200
    %v1513 = vunpack.c.h.b16 %v1197
    %v1514 = vunpack.c.h.b16 %v1198
    %v1515 = vunpack.c.h.b16 %v1199
    %v1516 = vunpack.c.h.b16 %v1200
    %v1517 = vunpack.c.l.b16 %v1201
    %v1518 = vunpack.c.l.b16 %v1202
    %v1519 = vunpack.c.l.b16 %v1203
    %v1520 = vunpack.c.l.b16 %v1204
    %v1521 = vunpack.c.h.b16 %v1201
    %v1522 = vunpack.c.h.b16 %v1202
    %v1523 = vunpack.c.h.b16 %v1203
    %v1524 = vunpack.c.h.b16 %v1204
    %v1525 = vunpack.c.l.b16 %v1205
    %v1526 = vunpack.c.l.b16 %v1206
    %v1527 = vunpack.c.l.b16 %v1207
    %v1528 = vunpack.c.l.b16 %v1208
    %v1529 = vunpack.c.h.b16 %v1205
    %v1530 = vunpack.c.h.b16 %v1206
    %v1531 = vunpack.c.h.b16 %v1207
    %v1532 = vunpack.c.h.b16 %v1208
    %v1533 = vunpack.c.l.b16 %v1209
    %v1534 = vunpack.c.l.b16 %v1210
    %v1535 = vunpack.c.l.b16 %v1211
    %v1536 = vunpack.c.l.b16 %v1212
    %v1537 = vunpack.c.h.b16 %v1209
    %v1538 = vunpack.c.h.b16 %v1210
    %v1539 = vunpack.c.h.b16 %v1211
    %v1540 = vunpack.c.h.b16 %v1212
    %v1541 = vunpack.c.l.b16 %v1213
    %v1542 = vunpack.c.l.b16 %v1214
    %v1543 = vunpack.c.l.b16 %v1215
    %v1544 = vunpack.c.l.b16 %v1216
    %v1545 = vunpack.c.h.b16 %v1213
    %v1546 = vunpack.c.h.b16 %v1214
    %v1547 = vunpack.c.h.b16 %v1215
    %v1548 = vunpack.c.h.b16 %v1216
    %v1549 = vunpack.c.l.b16 %v1217
    %v1550 = vunpack.c.l.b16 %v1218
    %v1551 = vunpack.c.l.b16 %v1219
    %v1552 = vunpack.c.l.b16 %v1220
    %v1553 = vunpack.c.h.b16 %v1217
    %v1554 = vunpack.c.h.b16 %v1218
    %v1555 = vunpack.c.h.b16 %v1219
    %v1556 = vunpack.c.h.b16 %v1220
    %v1557 = vunpack.c.l.b16 %v1221
    %v1558 = vunpack.c.l.b16 %v1222
    %v1559 = vunpack.c.l.b16 %v1223
    %v1560 = vunpack.c.l.b16 %v1224
    %v1561 = vunpack.c.h.b16 %v1221
    %v1562 = vunpack.c.h.b16 %v1222
    %v1563 = vunpack.c.h.b16 %v1223
    %v1564 = vunpack.c.h.b16 %v1224
    %v1565 = vunpack.c.l.b16 %v1225
    %v1566 = vunpack.c.l.b16 %v1226
    %v1567 = vunpack.c.l.b16 %v1227
    %v1568 = vunpack.c.l.b16 %v1228
    %v1569 = vunpack.c.h.b16 %v1225
    %v1570 = vunpack.c.h.b16 %v1226
    %v1571 = vunpack.c.h.b16 %v1227
    %v1572 = vunpack.c.h.b16 %v1228
    %v1573 = vunpack.c.l.b16 %v1229
    %v1574 = vunpack.c.l.b16 %v1230
    %v1575 = vunpack.c.l.b16 %v1231
    %v1576 = vunpack.c.l.b16 %v1232
    %v1577 = vunpack.c.h.b16 %v1229
    %v1578 = vunpack.c.h.b16 %v1230
    %v1579 = vunpack.c.h.b16 %v1231
    %v1580 = vunpack.c.h.b16 %v1232
    %v1581 = vunpack.c.l.b16 %v1233
    %v1582 = vunpack.c.l.b16 %v1234
    %v1583 = vunpack.c.l.b16 %v1235
    %v1584 = vunpack.c.l.b16 %v1236
    %v1585 = vunpack.c.h.b16 %v1233
    %v1586 = vunpack.c.h.b16 %v1234
    %v1587 = vunpack.c.h.b16 %v1235
    %v1588 = vunpack.c.h.b16 %v1236
    %v1589 = vunpack.c.l.b16 %v1237
    %v1590 = vunpack.c.l.b16 %v1238
    %v1591 = vunpack.c.l.b16 %v1239
    %v1592 = vunpack.c.l.b16 %v1240
    %v1593 = vunpack.c.h.b16 %v1237
    %v1594 = vunpack.c.h.b16 %v1238
    %v1595 = vunpack.c.h.b16 %v1239
    %v1596 = vunpack.c.h.b16 %v1240
    %v1597 = vunpack.c.l.b16 %v1241
    %v1598 = vunpack.c.l.b16 %v1242
    %v1599 = vunpack.c.l.b16 %v1243
    %v1600 = vunpack.c.l.b16 %v1244
    %v1601 = vunpack.c.h.b16 %v1241
    %v1602 = vunpack.c.h.b16 %v1242
    %v1603 = vunpack.c.h.b16 %v1243
    %v1604 = vunpack.c.h.b16 %v1244
    %v1605 = vunpack.c.l.b16 %v1245
    %v1606 = vunpack.c.l.b16 %v1246
    %v1607 = vunpack.c.l.b16 %v1247
    %v1608 = vunpack.c.l.b16 %v1248
    %v1609 = vunpack.c.h.b16 %v1245
    %v1610 = vunpack.c.h.b16 %v1246
    %v1611 = vunpack.c.h.b16 %v1247
    %v1612 = vunpack.c.h.b16 %v1248
    %v1613 = vunpack.c.l.b16 %v1249
    %v1614 = vunpack.c.l.b16 %v1250
    %v1615 = vunpack.c.l.b16 %v1251
    %v1616 = vunpack.c.l.b16 %v1252
    %v1617 = vunpack.c.h.b16 %v1249
    %v1618 = vunpack.c.h.b16 %v1250
    %v1619 = vunpack.c.h.b16 %v1251
    %v1620 = vunpack.c.h.b16 %v1252
    %v1621 = vunpack.c.l.b16 %v1253
    %v1622 = vunpack.c.l.b16 %v1254
    %v1623 = vunpack.c.l.b16 %v1255
    %v1624 = vunpack.c.l.b16 %v1256
    %v1625 = vunpack.c.h.b16 %v1253
    %v1626 = vunpack.c.h.b16 %v1254
    %v1627 = vunpack.c.h.b16 %v1255
    %v1628 = vunpack.c.h.b16 %v1256
    %v1629 = vunpack.c.l.b16 %v1257
    %v1630 = vunpack.c.l.b16 %v1258
    %v1631 = vunpack.c.l.b16 %v1259
    %v1632 = vunpack.c.l.b16 %v1260
    %v1633 = vunpack.c.h.b16 %v1257
    %v1634 = vunpack.c.h.b16 %v1258
    %v1635 = vunpack.c.h.b16 %v1259
    %v1636 = vunpack.c.h.b16 %v1260
    %v1637 = vunpack.c.l.b16 %v1261
    %v1638 = vunpack.c.l.b16 %v1262
    %v1639 = vunpack.c.l.b16 %v1263
    %v1640 = vunpack.c.l.b16 %v1264
    %v1641 = vunpack.c.h.b16 %v1261
    %v1642 = vunpack.c.h.b16 %v1262
    %v1643 = vunpack.c.h.b16 %v1263
    %v1644 = vunpack.c.h.b16 %v1264
    %v1645 = vunpack.c.l.b16 %v1265
    %v1646 = vunpack.c.l.b16 %v1266
    %v1647 = vunpack.c.l.b16 %v1267
    %v1648 = vunpack.c.l.b16 %v1268
    %v1649 = vunpack.c.h.b16 %v1265
    %v1650 = vunpack.c.h.b16 %v1266
    %v1651 = vunpack.c.h.b16 %v1267
    %v1652 = vunpack.c.h.b16 %v1268
    %v1653 = vpack.c.b16 %v1398, %v1397
    %v1654 = vpack.c.b16 %v1400, %v1399
    %v1655 = vpack.c.b16 %v1402, %v1401
    %v1656 = vpack.c.b16 %v1404, %v1403
    %v1657 = vpack.c.b16 %v1406, %v1405
    %v1658 = vpack.c.b16 %v1408, %v1407
    %v1659 = vpack.c.b16 %v1410, %v1409
    %v1660 = vpack.c.b16 %v1412, %v1411
    %v1661 = vpack.c.b16 %v1414, %v1413
    %v1662 = vpack.c.b16 %v1416, %v1415
    %v1663 = vpack.c.b16 %v1418, %v1417
    %v1664 = vpack.c.b16 %v1420, %v1419
    %v1665 = vpack.c.b16 %v1422, %v1421
    %v1666 = vpack.c.b16 %v1424, %v1423
    %v1667 = vpack.c.b16 %v1426, %v1425
    %v1668 = vpack.c.b16 %v1428, %v1427
    %v1669 = vpack.c.b16 %v1430, %v1429
    %v1670 = vpack.c.b16 %v1432, %v1431
    %v1671 = vpack.c.b16 %v1434, %v1433
    %v1672 = vpack.c.b16 %v1436, %v1435
    %v1673 = vpack.c.b16 %v1438, %v1437
    %v1674 = vpack.c.b16 %v1440, %v1439
    %v1675 = vpack.c.b16 %v1442, %v1441
    %v1676 = vpack.c.b16 %v1444, %v1443
    %v1677 = vpack.c.b16 %v1446, %v1445
    %v1678 = vpack.c.b16 %v1448, %v1447
    %v1679 = vpack.c.b16 %v1450, %v1449
    %v1680 = vpack.c.b16 %v1452, %v1451
    %v1681 = vpack.c.b16 %v1454, %v1453
    %v1682 = vpack.c.b16 %v1456, %v1455
    %v1683 = vpack.c.b16 %v1458, %v1457
    %v1684 = vpack.c.b16 %v1460, %v1459
    %v1685 = vpack.c.b16 %v1462, %v1461
    %v1686 = vpack.c.b16 %v1464, %v1463
    %v1687 = vpack.c.b16 %v1466, %v1465
    %v1688 = vpack.c.b16 %v1468, %v1467
    %v1689 = vpack.c.b16 %v1470, %v1469
    %v1690 = vpack.c.b16 %v1472, %v1471
    %v1691 = vpack.c.b16 %v1474, %v1473
    %v1692 = vpack.c.b16 %v1476, %v1475
    %v1693 = vpack.c.b16 %v1478, %v1477
    %v1694 = vpack.c.b16 %v1480, %v1479
    %v1695 = vpack.c.b16 %v1482, %v1481
    %v1696 = vpack.c.b16 %v1484, %v1483
    %v1697 = vpack.c.b16 %v1486, %v1485
    %v1698 = vpack.c.b16 %v1488, %v1487
    %v1699 = vpack.c.b16 %v1490, %v1489
    %v1700 = vpack.c.b16 %v1492, %v1491
    %v1701 = vpack.c.b16 %v1494, %v1493
    %v1702 = vpack.c.b16 %v1496, %v1495
    %v1703 = vpack.c.b16 %v1498, %v1497
    %v1704 = vpack.c.b16 %v1500, %v1499
    %v1705 = vpack.c.b16 %v1502, %v1501
    %v1706 = vpack.c.b16 %v1504, %v1503
    %v1707 = vpack.c.b16 %v1506, %v1505
    %v1708 = vpack.c.b16 %v1508, %v1507
    %v1709 = vpack.c.b16 %v1510, %v1509
    %v1710 = vpack.c.b16 %v1512, %v1511
    %v1711 = vpack.c.b16 %v1514, %v1513
    %v1712 = vpack.c.b16 %v1516, %v1515
    %v1713 = vpack.c.b16 %v1518, %v1517
    %v1714 = vpack.c.b16 %v1520, %v1519
    %v1715 = vpack.c.b16 %v1522, %v1521
    %v1716 = vpack.c.b16 %v1524, %v1523
    %v1717 = vpack.c.b16 %v1526, %v1525
    %v1718 = vpack.c.b16 %v1528, %v1527
    %v1719 = vpack.c.b16 %v1530, %v1529
    %v1720 = vpack.c.b16 %v1532, %v1531
    %v1721 = vpack.c.b16 %v1534, %v1533
    %v1722 = vpack.c.b16 %v1536, %v1535
    %v1723 = vpack.c.b16 %v1538, %v1537
    %v1724 = vpack.c.b16 %v1540, %v1539
    %v1725 = vpack.c.b16 %v1542, %v1541
    %v1726 = vpack.c.b16 %v1544, %v1543
    %v1727 = vpack.c.b16 %v1546, %v1545
    %v1728 = vpack.c.b16 %v1548, %v1547
    %v1729 = vpack.c.b16 %v1550, %v1549
    %v1730 = vpack.c.b16 %v1552, %v1551
    %v1731 = vpack.c.b16 %v1554, %v1553
    %v1732 = vpack.c.b16 %v1556, %v1555
    %v1733 = vpack.c.b16 %v1558, %v1557
    %v1734 = vpack.c.b16 %v1560, %v1559
    %v1735 = vpack.c.b16 %v1562, %v1561
    %v1736 = vpack.c.b16 %v1564, %v1563
    %v1737 = vpack.c.b16 %v1566, %v1565
    %v1738 = vpack.c.b16 %v1568, %v1567
    %v1739 = vpack.c.b16 %v1570, %v1569
    %v1740 = vpack.c.b16 %v1572, %v1571
    %v1741 = vpack.c.b16 %v1574, %v1573
    %v1742 = vpack.c.b16 %v1576, %v1575
    %v1743 = vpack.c.b16 %v1578, %v1577
    %v1744 = vpack.c.b16 %v1580, %v1579
    %v1745 = vpack.c.b16 %v1582, %v1581
    %v1746 = vpack.c.b16 %v1584, %v1583
    %v1747 = vpack.c.b16 %v1586, %v1585
    %v1748 = vpack.c.b16 %v1588, %v1587
    %v1749 = vpack.c.b16 %v1590, %v1589
    %v1750 = vpack.c.b16 %v1592, %v1591
    %v1751 = vpack.c.b16 %v1594, %v1593
    %v1752 = vpack.c.b16 %v1596, %v1595
    %v1753 = vpack.c.b16 %v1598, %v1597
    %v1754 = vpack.c.b16 %v1600, %v1599
    %v1755 = vpack.c.b16 %v1602, %v1601
    %v1756 = vpack.c.b16 %v1604, %v1603
    %v1757 = vpack.c.b16 %v1606, %v1605
    %v1758 = vpack.c.b16 %v1608, %v1607
    %v1759 = vpack.c.b16 %v1610, %v1609
    %v1760 = vpack.c.b16 %v1612, %v1611
    %v1761 = vpack.c.b16 %v1614, %v1613
    %v1762 = vpack.c.b16 %v1616, %v1615
    %v1763 = vpack.c.b16 %v1618, %v1617
    %v1764 = vpack.c.b16 %v1620, %v1619
    %v1765 = vpack.c.b16 %v1622, %v1621
    %v1766 = vpack.c.b16 %v1624, %v1623
    %v1767 = vpack.c.b16 %v1626, %v1625
    %v1768 = vpack.c.b16 %v1628, %v1627
    %v1769 = vpack.c.b16 %v1630, %v1629
    %v1770 = vpack.c.b16 %v1632, %v1631
    %v1771 = vpack.c.b16 %v1634, %v1633
    %v1772 = vpack.c.b16 %v1636, %v1635
    %v1773 = vpack.c.b16 %v1638, %v1637
    %v1774 = vpack.c.b16 %v1640, %v1639
    %v1775 = vpack.c.b16 %v1642, %v1641
    %v1776 = vpack.c.b16 %v1644, %v1643
    %v1777 = vpack.c.b16 %v1646, %v1645
    %v1778 = vpack.c.b16 %v1648, %v1647
    %v1779 = vpack.c.b16 %v1650, %v1649
    %v1780 = vpack.c.b16 %v1652, %v1651
    %1909 = vst [vmem:[#allocation2] sm:$0xff] %v1653
    %1910 = vst [vmem:[#allocation2 + $0x8] sm:$0xff] %v1654
    %1911 = vst [vmem:[#allocation2 + $0x10] sm:$0xff] %v1655
    %1912 = vst [vmem:[#allocation2 + $0x18] sm:$0xff] %v1656
    %1913 = vst [vmem:[#allocation2 + $0x20] sm:$0xff] %v1657
    %1914 = vst [vmem:[#allocation2 + $0x28] sm:$0xff] %v1658
    %1915 = vst [vmem:[#allocation2 + $0x30] sm:$0xff] %v1659
    %1916 = vst [vmem:[#allocation2 + $0x38] sm:$0xff] %v1660
    %1917 = vst [vmem:[#allocation2 + $0x40] sm:$0xff] %v1661
    %1918 = vst [vmem:[#allocation2 + $0x48] sm:$0xff] %v1662
    %1919 = vst [vmem:[#allocation2 + $0x50] sm:$0xff] %v1663
    %1920 = vst [vmem:[#allocation2 + $0x58] sm:$0xff] %v1664
    %1921 = vst [vmem:[#allocation2 + $0x60] sm:$0xff] %v1665
    %1922 = vst [vmem:[#allocation2 + $0x68] sm:$0xff] %v1666
    %1923 = vst [vmem:[#allocation2 + $0x70] sm:$0xff] %v1667
    %1924 = vst [vmem:[#allocation2 + $0x78] sm:$0xff] %v1668
    %1925 = vst [vmem:[#allocation2 + $0x80] sm:$0xff] %v1669
    %1926 = vst [vmem:[#allocation2 + $0x88] sm:$0xff] %v1670
    %1927 = vst [vmem:[#allocation2 + $0x90] sm:$0xff] %v1671
    %1928 = vst [vmem:[#allocation2 + $0x98] sm:$0xff] %v1672
    %1929 = vst [vmem:[#allocation2 + $0xa0] sm:$0xff] %v1673
    %1930 = vst [vmem:[#allocation2 + $0xa8] sm:$0xff] %v1674
    %1931 = vst [vmem:[#allocation2 + $0xb0] sm:$0xff] %v1675
    %1932 = vst [vmem:[#allocation2 + $0xb8] sm:$0xff] %v1676
    %1933 = vst [vmem:[#allocation2 + $0xc0] sm:$0xff] %v1677
    %1934 = vst [vmem:[#allocation2 + $0xc8] sm:$0xff] %v1678
    %1935 = vst [vmem:[#allocation2 + $0xd0] sm:$0xff] %v1679
    %1936 = vst [vmem:[#allocation2 + $0xd8] sm:$0xff] %v1680
    %1937 = vst [vmem:[#allocation2 + $0xe0] sm:$0xff] %v1681
    %1938 = vst [vmem:[#allocation2 + $0xe8] sm:$0xff] %v1682
    %1939 = vst [vmem:[#allocation2 + $0xf0] sm:$0xff] %v1683
    %1940 = vst [vmem:[#allocation2 + $0xf8] sm:$0xff] %v1684
    %1941 = vst [vmem:[#allocation2 + $0x100] sm:$0xff] %v1685
    %1942 = vst [vmem:[#allocation2 + $0x108] sm:$0xff] %v1686
    %1943 = vst [vmem:[#allocation2 + $0x110] sm:$0xff] %v1687
    %1944 = vst [vmem:[#allocation2 + $0x118] sm:$0xff] %v1688
    %1945 = vst [vmem:[#allocation2 + $0x120] sm:$0xff] %v1689
    %1946 = vst [vmem:[#allocation2 + $0x128] sm:$0xff] %v1690
    %1947 = vst [vmem:[#allocation2 + $0x130] sm:$0xff] %v1691
    %1948 = vst [vmem:[#allocation2 + $0x138] sm:$0xff] %v1692
    %1949 = vst [vmem:[#allocation2 + $0x140] sm:$0xff] %v1693
    %1950 = vst [vmem:[#allocation2 + $0x148] sm:$0xff] %v1694
    %1951 = vst [vmem:[#allocation2 + $0x150] sm:$0xff] %v1695
    %1952 = vst [vmem:[#allocation2 + $0x158] sm:$0xff] %v1696
    %1953 = vst [vmem:[#allocation2 + $0x160] sm:$0xff] %v1697
    %1954 = vst [vmem:[#allocation2 + $0x168] sm:$0xff] %v1698
    %1955 = vst [vmem:[#allocation2 + $0x170] sm:$0xff] %v1699
    %1956 = vst [vmem:[#allocation2 + $0x178] sm:$0xff] %v1700
    %1957 = vst [vmem:[#allocation2 + $0x180] sm:$0xff] %v1701
    %1958 = vst [vmem:[#allocation2 + $0x188] sm:$0xff] %v1702
    %1959 = vst [vmem:[#allocation2 + $0x190] sm:$0xff] %v1703
    %1960 = vst [vmem:[#allocation2 + $0x198] sm:$0xff] %v1704
    %1961 = vst [vmem:[#allocation2 + $0x1a0] sm:$0xff] %v1705
    %1962 = vst [vmem:[#allocation2 + $0x1a8] sm:$0xff] %v1706
    %1963 = vst [vmem:[#allocation2 + $0x1b0] sm:$0xff] %v1707
    %1964 = vst [vmem:[#allocation2 + $0x1b8] sm:$0xff] %v1708
    %1965 = vst [vmem:[#allocation2 + $0x1c0] sm:$0xff] %v1709
    %1966 = vst [vmem:[#allocation2 + $0x1c8] sm:$0xff] %v1710
    %1967 = vst [vmem:[#allocation2 + $0x1d0] sm:$0xff] %v1711
    %1968 = vst [vmem:[#allocation2 + $0x1d8] sm:$0xff] %v1712
    %1969 = vst [vmem:[#allocation2 + $0x1e0] sm:$0xff] %v1713
    %1970 = vst [vmem:[#allocation2 + $0x1e8] sm:$0xff] %v1714
    %1971 = vst [vmem:[#allocation2 + $0x1f0] sm:$0xff] %v1715
    %1972 = vst [vmem:[#allocation2 + $0x1f8] sm:$0xff] %v1716
    %1973 = vst [vmem:[#allocation2 + $0x200] sm:$0xff] %v1717
    %1974 = vst [vmem:[#allocation2 + $0x208] sm:$0xff] %v1718
    %1975 = vst [vmem:[#allocation2 + $0x210] sm:$0xff] %v1719
    %1976 = vst [vmem:[#allocation2 + $0x218] sm:$0xff] %v1720
    %1977 = vst [vmem:[#allocation2 + $0x220] sm:$0xff] %v1721
    %1978 = vst [vmem:[#allocation2 + $0x228] sm:$0xff] %v1722
    %1979 = vst [vmem:[#allocation2 + $0x230] sm:$0xff] %v1723
    %1980 = vst [vmem:[#allocation2 + $0x238] sm:$0xff] %v1724
    %1981 = vst [vmem:[#allocation2 + $0x240] sm:$0xff] %v1725
    %1982 = vst [vmem:[#allocation2 + $0x248] sm:$0xff] %v1726
    %1983 = vst [vmem:[#allocation2 + $0x250] sm:$0xff] %v1727
    %1984 = vst [vmem:[#allocation2 + $0x258] sm:$0xff] %v1728
    %1985 = vst [vmem:[#allocation2 + $0x260] sm:$0xff] %v1729
    %1986 = vst [vmem:[#allocation2 + $0x268] sm:$0xff] %v1730
    %1987 = vst [vmem:[#allocation2 + $0x270] sm:$0xff] %v1731
    %1988 = vst [vmem:[#allocation2 + $0x278] sm:$0xff] %v1732
    %1989 = vst [vmem:[#allocation2 + $0x280] sm:$0xff] %v1733
    %1990 = vst [vmem:[#allocation2 + $0x288] sm:$0xff] %v1734
    %1991 = vst [vmem:[#allocation2 + $0x290] sm:$0xff] %v1735
    %1992 = vst [vmem:[#allocation2 + $0x298] sm:$0xff] %v1736
    %1993 = vst [vmem:[#allocation2 + $0x2a0] sm:$0xff] %v1737
    %1994 = vst [vmem:[#allocation2 + $0x2a8] sm:$0xff] %v1738
    %1995 = vst [vmem:[#allocation2 + $0x2b0] sm:$0xff] %v1739
    %1996 = vst [vmem:[#allocation2 + $0x2b8] sm:$0xff] %v1740
    %1997 = vst [vmem:[#allocation2 + $0x2c0] sm:$0xff] %v1741
    %1998 = vst [vmem:[#allocation2 + $0x2c8] sm:$0xff] %v1742
    %1999 = vst [vmem:[#allocation2 + $0x2d0] sm:$0xff] %v1743
    %2000 = vst [vmem:[#allocation2 + $0x2d8] sm:$0xff] %v1744
    %2001 = vst [vmem:[#allocation2 + $0x2e0] sm:$0xff] %v1745
    %2002 = vst [vmem:[#allocation2 + $0x2e8] sm:$0xff] %v1746
    %2003 = vst [vmem:[#allocation2 + $0x2f0] sm:$0xff] %v1747
    %2004 = vst [vmem:[#allocation2 + $0x2f8] sm:$0xff] %v1748
    %2005 = vst [vmem:[#allocation2 + $0x300] sm:$0xff] %v1749
    %2006 = vst [vmem:[#allocation2 + $0x308] sm:$0xff] %v1750
    %2007 = vst [vmem:[#allocation2 + $0x310] sm:$0xff] %v1751
    %2008 = vst [vmem:[#allocation2 + $0x318] sm:$0xff] %v1752
    %2009 = vst [vmem:[#allocation2 + $0x320] sm:$0xff] %v1753
    %2010 = vst [vmem:[#allocation2 + $0x328] sm:$0xff] %v1754
    %2011 = vst [vmem:[#allocation2 + $0x330] sm:$0xff] %v1755
    %2012 = vst [vmem:[#allocation2 + $0x338] sm:$0xff] %v1756
    %2013 = vst [vmem:[#allocation2 + $0x340] sm:$0xff] %v1757
    %2014 = vst [vmem:[#allocation2 + $0x348] sm:$0xff] %v1758
    %2015 = vst [vmem:[#allocation2 + $0x350] sm:$0xff] %v1759
    %2016 = vst [vmem:[#allocation2 + $0x358] sm:$0xff] %v1760
    %2017 = vst [vmem:[#allocation2 + $0x360] sm:$0xff] %v1761
    %2018 = vst [vmem:[#allocation2 + $0x368] sm:$0xff] %v1762
    %2019 = vst [vmem:[#allocation2 + $0x370] sm:$0xff] %v1763
    %2020 = vst [vmem:[#allocation2 + $0x378] sm:$0xff] %v1764
    %2021 = vst [vmem:[#allocation2 + $0x380] sm:$0xff] %v1765
    %2022 = vst [vmem:[#allocation2 + $0x388] sm:$0xff] %v1766
    %2023 = vst [vmem:[#allocation2 + $0x390] sm:$0xff] %v1767
    %2024 = vst [vmem:[#allocation2 + $0x398] sm:$0xff] %v1768
    %2025 = vst [vmem:[#allocation2 + $0x3a0] sm:$0xff] %v1769
    %2026 = vst [vmem:[#allocation2 + $0x3a8] sm:$0xff] %v1770
    %2027 = vst [vmem:[#allocation2 + $0x3b0] sm:$0xff] %v1771
    %2028 = vst [vmem:[#allocation2 + $0x3b8] sm:$0xff] %v1772
    %2029 = vst [vmem:[#allocation2 + $0x3c0] sm:$0xff] %v1773
    %2030 = vst [vmem:[#allocation2 + $0x3c8] sm:$0xff] %v1774
    %2031 = vst [vmem:[#allocation2 + $0x3d0] sm:$0xff] %v1775
    %2032 = vst [vmem:[#allocation2 + $0x3d8] sm:$0xff] %v1776
    %2033 = vst [vmem:[#allocation2 + $0x3e0] sm:$0xff] %v1777
    %2034 = vst [vmem:[#allocation2 + $0x3e8] sm:$0xff] %v1778
    %2035 = vst [vmem:[#allocation2 + $0x3f0] sm:$0xff] %v1779
    %2036 = vst [vmem:[#allocation2 + $0x3f8] sm:$0xff] %v1780
    // Predicated region
    $region10: #{tpu_custom_call.1} parent=1 // pred_check
      _
    $region11: #{tpu_custom_call.1} parent=1 // pred_check_branch
      %2038 = sbr.rel (0) target = $region13
    $region12: #{tpu_custom_call.1} parent=1 // pred_region
      %s2040 = ssub.s32 16384, 16384
      %2041 = vsyncadd [#allocation3], %s2040
      %s2042 = sshll.u32 [#allocation2], 4
      %s2043 = int_to_ptr.vmem [resolvable:$true] %s2042
      %2048 = dma.vmem_to_hbm [thread:$0]  %s2043, 16384, %s2, [#allocation3], 256, 256, 16
    $region13: #{tpu_custom_call.1} parent=1 // pred_fallthru
      _
    // Predicated region
    $region14: #{tpu_custom_call.1} parent=1 // pred_check
      _
    $region15: #{tpu_custom_call.1} parent=1 // pred_check_branch
      %2050 = sbr.rel (0) target = $region17
    $region16: #{tpu_custom_call.1} parent=1 // pred_region
      %2051 = dma.done [#allocation3], 16384
    $region17: #{tpu_custom_call.1} parent=1 // pred_fallthru
      _
    %2052 = vsyncpa [#allocation3], 1

</llo_original>
